<compile_context>
chip_gen: v6e
topology: v6e:2x2x1
jax: 0.10.0
libtpu: 0.0.40
codegen_flags: <defaults>
</compile_context>

<pallas_src>
import functools

import jax
import jax.numpy as jnp
from jax.experimental import pallas as pl
from jax.experimental.pallas import tpu as pltpu


def _round_up(x, m):
    return (x + m - 1) // m * m


def _lstm_chunk_kernel(embeds_ref, h0_ref, c0_ref, w_ih_ref, w_hh_ref, b_ref,
                       h_out_ref, c_out_ref, xg_ref, *,
                       seq_len, t_chunk, mask_tail, unroll):
    """One (batch-tile, time-chunk) grid step of the LSTM recurrence.

    embeds_ref : (TC*BT, E)   bf16, time-major rows (row = t_local*BT + b_loc)
    h0/c0      : (BT, HP)     f32
    w_ih       : (E, 4*HP)    bf16 ; w_hh: (HP, 4*HP) bf16 ; b: (1, 4*HP) f32
    h_out/c_out: (BT, HP)     f32, VMEM-resident carry across the time axis
    xg_ref     : (TC*BT, 4*HP) f32 scratch (this chunk's input projection)
    """
    c_idx = pl.program_id(1)
    bt, hp = h0_ref.shape

    # First time chunk of this batch tile: initialize the carried state.
    @pl.when(c_idx == 0)
    def _init():
        h_out_ref[...] = h0_ref[...]
        c_out_ref[...] = c0_ref[...]

    # Input projection for every timestep of this chunk in one MXU matmul,
    # bias folded in once (kept off the serial per-step critical path).
    xg_ref[...] = (
        jnp.dot(embeds_ref[...], w_ih_ref[...],
                preferred_element_type=jnp.float32)
        + b_ref[...]
    )

    w_hh = w_hh_ref[...]                       # (HP, 4HP) bf16, loop-invariant

    def step(t, carry):
        h, c = carry                           # f32 (BT, HP)
        off = pl.multiple_of(t * bt, bt)
        gates = xg_ref[pl.ds(off, bt), :] + jnp.dot(
            h.astype(w_hh.dtype), w_hh, preferred_element_type=jnp.float32)
        # Gate blocks are 128-lane aligned (HP % 128 == 0): each slice is
        # whole vregs.  Consume each gate close to where it is produced so
        # the live set stays ~ gates + a few (BT,HP) blocks; BT is capped in
        # the wrapper to keep this under the 64-vreg file.
        # PyTorch gate order: [i, f, g, o].
        i_g = jax.nn.sigmoid(gates[:, 0 * hp:1 * hp])
        g_g = jnp.tanh(gates[:, 2 * hp:3 * hp])
        ig = i_g * g_g
        f_g = jax.nn.sigmoid(gates[:, 1 * hp:2 * hp])
        c_new = f_g * c + ig
        o_g = jax.nn.sigmoid(gates[:, 3 * hp:4 * hp])
        h_new = o_g * jnp.tanh(c_new)
        if mask_tail:
            # Padded tail timesteps (S rounded up to a chunk multiple): no-op.
            valid = (c_idx * t_chunk + t) < seq_len
            h_new = jnp.where(valid, h_new, h)
            c_new = jnp.where(valid, c_new, c)
        return h_new, c_new

    h_fin, c_fin = jax.lax.fori_loop(
        0, t_chunk, step, (h_out_ref[...], c_out_ref[...]), unroll=unroll)

    h_out_ref[...] = h_fin
    c_out_ref[...] = c_fin


def classifier_forward(x_ids, hidden, params, *, batch_tile=32,
                       time_chunk=None, core_parallel_batch=False):
    """x_ids: (B, S) int token ids. hidden: (h0, c0) each (B, H) f32.

    batch_tile: batch rows per grid step (sweep 32/64; >=8, multiple of 8).
    time_chunk: timesteps per grid step (None -> auto-sized for VMEM budget).
    core_parallel_batch: set True on v7x to shard batch tiles over both TCs.
    """
    h0, c0 = hidden
    emb_table = params["embedding"]   # (V, E)
    w_ih = params["w_ih"]             # (E, 4H)
    w_hh = params["w_hh"]             # (H, 4H)
    b = params["b"]                   # (1, 4H)  (= b_ih + b_hh)
    fc_w = params["fc_w"]             # (H, O)
    fc_b = params["fc_b"]             # (1, O)

    B, S = x_ids.shape
    V, E = emb_table.shape
    H = h0.shape[1]

    HP = _round_up(H, 128)            # lane-align each gate block

    # ---- Batch tile (sublane-aligned, capped by the padded batch). ----
    BT = min(_round_up(max(batch_tile, 8), 8), _round_up(B, 8))
    Bp = _round_up(B, BT)
    Nb = Bp // BT

    # ---- Time chunk sized against a VMEM budget: per timestep we hold
    #      4HP f32 of xg scratch + 2x (double-buffered) E bf16 of embeddings
    #      per batch row.  Weights (double-buffered) are subtracted from the
    #      budget; everything stays under the 48 MiB scoped limit below. ----
    weight_bytes = 2 * (E * 4 * HP * 2 + HP * 4 * HP * 2 + 4 * HP * 4)
    state_bytes = 8 * BT * HP * 4
    time_budget = max(8 * 1024 * 1024,
                      44 * 1024 * 1024 - weight_bytes - state_bytes)
    per_step_bytes = BT * (4 * HP * 4 + 2 * E * 2)
    if time_chunk is None:
        time_chunk = max(1, time_budget // per_step_bytes)
    TC = max(1, min(S, int(time_chunk)))
    NC = pl.cdiv(S, TC)
    Sp = NC * TC

    # ---- Pad parameters so each of the four gates occupies its own 128-lane
    #      block.  Padded rows/cols are zero, so padded hidden/cell lanes stay
    #      exactly zero through the recurrence. ----
    def pad_gate_cols(w, rows_to=None):
        rows = w.shape[0]
        w4 = w.reshape(rows, 4, H)
        w4 = jnp.pad(w4, ((0, 0), (0, 0), (0, HP - H)))
        w2 = w4.reshape(rows, 4 * HP)
        if rows_to is not None and rows_to > rows:
            w2 = jnp.pad(w2, ((0, rows_to - rows), (0, 0)))
        return w2

    w_ih_p = pad_gate_cols(w_ih).astype(jnp.bfloat16)              # (E, 4HP)
    w_hh_p = pad_gate_cols(w_hh, rows_to=HP).astype(jnp.bfloat16)  # (HP, 4HP)
    b_p = pad_gate_cols(b).astype(jnp.float32)                     # (1, 4HP)

    h0_p = jnp.zeros((Bp, HP), jnp.float32).at[:B, :H].set(h0)
    c0_p = jnp.zeros((Bp, HP), jnp.float32).at[:B, :H].set(c0)

    # ---- Embedding lookup laid out as (Nb, Sp*BT, E), time-major inside each
    #      batch tile (row = t*BT + b_local).  Padded batch rows / padded tail
    #      timesteps point at an appended all-zero embedding row. ----
    ids_p = jnp.full((Bp, Sp), V, dtype=jnp.int32).at[:B, :S].set(
        x_ids.astype(jnp.int32))
    ids_r = ids_p.reshape(Nb, BT, Sp).transpose(0, 2, 1).reshape(Nb, Sp * BT)
    emb_ext = jnp.concatenate(
        [emb_table, jnp.zeros((1, E), emb_table.dtype)], axis=0)
    embeds = jnp.take(emb_ext, ids_r, axis=0).astype(jnp.bfloat16)

    kernel = functools.partial(
        _lstm_chunk_kernel,
        seq_len=S, t_chunk=TC, mask_tail=(Sp != S), unroll=min(8, TC))

    # On v7x, CORE_PARALLEL on the batch axis lets the second TensorCore take
    # batch shards; plain PARALLEL is the portable default.
    batch_sem = pltpu.CORE_PARALLEL if core_parallel_batch else pltpu.PARALLEL

    h_out, c_out = pl.pallas_call(
        kernel,
        out_shape=(
            jax.ShapeDtypeStruct((Bp, HP), jnp.float32),   # h_T (padded)
            jax.ShapeDtypeStruct((Bp, HP), jnp.float32),   # c_T (padded)
        ),
        grid_spec=pltpu.PrefetchScalarGridSpec(
            num_scalar_prefetch=0,
            grid=(Nb, NC),                                 # (batch tiles, time chunks)
            in_specs=[
                pl.BlockSpec((None, TC * BT, E), lambda i, c: (i, c, 0)),  # embeds
                pl.BlockSpec((BT, HP), lambda i, c: (i, 0)),               # h0
                pl.BlockSpec((BT, HP), lambda i, c: (i, 0)),               # c0
                pl.BlockSpec((E, 4 * HP), lambda i, c: (0, 0)),            # W_ih
                pl.BlockSpec((HP, 4 * HP), lambda i, c: (0, 0)),           # W_hh
                pl.BlockSpec((1, 4 * HP), lambda i, c: (0, 0)),            # bias
            ],
            out_specs=[
                # Constant along the time axis -> VMEM-resident carry.
                pl.BlockSpec((BT, HP), lambda i, c: (i, 0)),
                pl.BlockSpec((BT, HP), lambda i, c: (i, 0)),
            ],
            scratch_shapes=[
                pltpu.VMEM((TC * BT, 4 * HP), jnp.float32),  # x@W_ih+b, chunk
            ],
        ),
        compiler_params=pltpu.CompilerParams(
            dimension_semantics=(batch_sem, pltpu.ARBITRARY),
            vmem_limit_bytes=48 * 1024 * 1024,   # > 16/32 MiB defaults, < v7x 64 MiB
        ),
    )(embeds, h0_p, c0_p, w_ih_p, w_hh_p, b_p)

    # Head in plain JAX on the last hidden state only (dropout = identity in
    # eval).  sig_out.view(B, -1)[:, -1] == sigmoid(fc(h_T))[:, -1].
    h_T = h_out[:B, :H]
    c_T = c_out[:B, :H]
    logits = jnp.dot(h_T, fc_w) + fc_b          # (B, O)
    sig_last = jax.nn.sigmoid(logits)[:, -1]    # (B,)
    return sig_last, (h_T, c_T)


def classifier_reference(x_ids, hidden, params):
    """Pure-JAX f32 reference (same math as the PyTorch module, eval mode)."""
    h, c = hidden
    H = h.shape[1]
    emb = params["embedding"][x_ids]                       # (B, S, E)
    w_ih, w_hh, b = params["w_ih"], params["w_hh"], params["b"]

    def step(carry, x_t):
        h, c = carry
        gates = x_t @ w_ih + h @ w_hh + b                  # (B, 4H)
        i = jax.nn.sigmoid(gates[:, 0 * H:1 * H])
        f = jax.nn.sigmoid(gates[:, 1 * H:2 * H])
        g = jnp.tanh(gates[:, 2 * H:3 * H])
        o = jax.nn.sigmoid(gates[:, 3 * H:4 * H])
        c = f * c + i * g
        h = o * jnp.tanh(c)
        return (h, c), None

    (h, c), _ = jax.lax.scan(step, (h, c), jnp.swapaxes(emb, 0, 1))
    logits = h @ params["fc_w"] + params["fc_b"]
    return jax.nn.sigmoid(logits)[:, -1], (h, c)


def init_params(key, vocab_size, embedding_dim, hidden_dim, output_size):
    ks = jax.random.split(key, 6)
    scale = 0.1
    return {
        "embedding": scale * jax.random.normal(
            ks[0], (vocab_size, embedding_dim), jnp.float32),
        "w_ih": scale * jax.random.normal(
            ks[1], (embedding_dim, 4 * hidden_dim), jnp.float32),
        "w_hh": scale * jax.random.normal(
            ks[2], (hidden_dim, 4 * hidden_dim), jnp.float32),
        "b": scale * jax.random.normal(
            ks[3], (1, 4 * hidden_dim), jnp.float32),
        "fc_w": scale * jax.random.normal(
            ks[4], (hidden_dim, output_size), jnp.float32),
        "fc_b": scale * jax.random.normal(
            ks[5], (1, output_size), jnp.float32),
    }


if __name__ == "__main__":
    # Small shapes consistent with the module's forward pass.
    vocab_size = 50
    embedding_dim = 16
    hidden_dim = 32
    output_size = 1
    batch = 4
    seq = 8

    key = jax.random.PRNGKey(0)
    k_params, k_x = jax.random.split(key)

    params = init_params(k_params, vocab_size, embedding_dim,
                         hidden_dim, output_size)
    x_ids = jax.random.randint(k_x, (batch, seq), 0, vocab_size, jnp.int32)

    # init_hidden: zeros of shape (batch, hidden_dim) for both h and c.
    h0 = jnp.zeros((batch, hidden_dim), jnp.float32)
    c0 = jnp.zeros((batch, hidden_dim), jnp.float32)

    # time_chunk=4 exercises the chunked-time grid (NC=2) at the toy size.
    fwd = jax.jit(functools.partial(classifier_forward, time_chunk=4))
    sig_out, (h_n, c_n) = fwd(x_ids, (h0, c0), params)
    jax.block_until_ready((sig_out, h_n, c_n))

    # Tolerance check vs. a pure-JAX f32 reference (kernel uses bf16 on the
    # MXU operands, f32 state/accumulation).
    ref_sig, (ref_h, ref_c) = classifier_reference(x_ids, (h0, c0), params)

    assert sig_out.shape == (batch,)
    assert h_n.shape == (batch, hidden_dim)
    assert c_n.shape == (batch, hidden_dim)
    assert bool(jnp.all(jnp.isfinite(sig_out)))
    assert bool(jnp.allclose(sig_out, ref_sig, atol=2e-2, rtol=2e-2))
    assert bool(jnp.allclose(h_n, ref_h, atol=2e-2, rtol=2e-2))
    assert bool(jnp.allclose(c_n, ref_c, atol=3e-2, rtol=3e-2))
    print("KERNEL_OK")
</pallas_src>

<mosaic_0001>
module attributes {stable_mosaic.version = 11 : i64} {
  func.func @_lstm_chunk_kernel(%arg0: i32, %arg1: i32, %arg2: memref<1x32x16xbf16, #tpu.memory_space<vmem>>, %arg3: memref<8x128xf32, #tpu.memory_space<vmem>>, %arg4: memref<8x128xf32, #tpu.memory_space<vmem>>, %arg5: memref<16x512xbf16, #tpu.memory_space<vmem>>, %arg6: memref<128x512xbf16, #tpu.memory_space<vmem>>, %arg7: memref<1x512xf32, #tpu.memory_space<vmem>>, %arg8: memref<8x128xf32, #tpu.memory_space<vmem>>, %arg9: memref<8x128xf32, #tpu.memory_space<vmem>>, %arg10: memref<32x512xf32, #tpu.memory_space<vmem>>) attributes {dimension_semantics = [#tpu.dimension_semantics<parallel>, #tpu.dimension_semantics<arbitrary>], iteration_bounds = array<i64: 1, 2>, scalar_prefetch = 0 : i64, scratch_operands = 1 : i64, tpu.core_type = #tpu.core_type<tc>, window_params = [{transform_indices = @transform_0, window_bounds = array<i64: 1, 32, 16>}, {transform_indices = @transform_1, window_bounds = array<i64: 8, 128>}, {transform_indices = @transform_2, window_bounds = array<i64: 8, 128>}, {pipeline_mode = #tpu.pipeline_mode<synchronous>, transform_indices = @transform_3, window_bounds = array<i64: 16, 512>}, {pipeline_mode = #tpu.pipeline_mode<synchronous>, transform_indices = @transform_4, window_bounds = array<i64: 128, 512>}, {pipeline_mode = #tpu.pipeline_mode<synchronous>, transform_indices = @transform_5, window_bounds = array<i64: 1, 512>}, {transform_indices = @transform_6, window_bounds = array<i64: 8, 128>}, {transform_indices = @transform_7, window_bounds = array<i64: 8, 128>}]} {
    %c0_i32 = arith.constant 0 : i32
    %0 = arith.cmpi eq, %arg1, %c0_i32 : i32
    %1 = arith.extui %0 : i1 to i32
    %c0_i32_0 = arith.constant 0 : i32
    %2 = arith.cmpi ne, %1, %c0_i32_0 : i32
    scf.if %2 {
      %c0_43 = arith.constant 0 : index
      %c0_44 = arith.constant 0 : index
      %144 = vector.load %arg3[%c0_43, %c0_44] : memref<8x128xf32, #tpu.memory_space<vmem>>, vector<8x128xf32>
      %c0_45 = arith.constant 0 : index
      %c0_46 = arith.constant 0 : index
      %145 = vector.load %arg8[%c0_45, %c0_46] : memref<8x128xf32, #tpu.memory_space<vmem>>, vector<8x128xf32>
      tpu.vector_store %arg8[%c0_45, %c0_46], %144 {strides = array<i32>} : memref<8x128xf32, #tpu.memory_space<vmem>>, vector<8x128xf32>,
      %c0_47 = arith.constant 0 : index
      %c0_48 = arith.constant 0 : index
      %146 = vector.load %arg4[%c0_47, %c0_48] : memref<8x128xf32, #tpu.memory_space<vmem>>, vector<8x128xf32>
      %c0_49 = arith.constant 0 : index
      %c0_50 = arith.constant 0 : index
      %147 = vector.load %arg9[%c0_49, %c0_50] : memref<8x128xf32, #tpu.memory_space<vmem>>, vector<8x128xf32>
      tpu.vector_store %arg9[%c0_49, %c0_50], %146 {strides = array<i32>} : memref<8x128xf32, #tpu.memory_space<vmem>>, vector<8x128xf32>,
    } else {
    }
    %c0 = arith.constant 0 : index
    %c0_1 = arith.constant 0 : index
    %c0_2 = arith.constant 0 : index
    %3 = vector.load %arg2[%c0, %c0_1, %c0_2] : memref<1x32x16xbf16, #tpu.memory_space<vmem>>, vector<1x32x16xbf16>
    %4 = vector.shape_cast %3 : vector<1x32x16xbf16> to vector<32x16xbf16>
    %c0_3 = arith.constant 0 : index
    %c0_4 = arith.constant 0 : index
    %5 = vector.load %arg5[%c0_3, %c0_4] : memref<16x512xbf16, #tpu.memory_space<vmem>>, vector<16x512xbf16>
    %cst = arith.constant dense<0.000000e+00> : vector<32x512xf32>
    %6 = tpu.matmul %4, %5, %cst {dimension_numbers = #tpu.dot_dimension_numbers<[1], [0], [0], [1], [0, 0, 1, 1], [], []>} : vector<32x16xbf16>, vector<16x512xbf16>, vector<32x512xf32> -> vector<32x512xf32>
    %c0_5 = arith.constant 0 : index
    %c0_6 = arith.constant 0 : index
    %7 = vector.load %arg7[%c0_5, %c0_6] : memref<1x512xf32, #tpu.memory_space<vmem>>, vector<1x512xf32>
    %8 = vector.broadcast %7 : vector<1x512xf32> to vector<32x512xf32>
    %9 = arith.addf %6, %8 : vector<32x512xf32>
    %c0_7 = arith.constant 0 : index
    %c0_8 = arith.constant 0 : index
    %10 = vector.load %arg10[%c0_7, %c0_8] : memref<32x512xf32, #tpu.memory_space<vmem>>, vector<32x512xf32>
    tpu.vector_store %arg10[%c0_7, %c0_8], %9 {strides = array<i32>} : memref<32x512xf32, #tpu.memory_space<vmem>>, vector<32x512xf32>,
    %c0_9 = arith.constant 0 : index
    %c0_10 = arith.constant 0 : index
    %11 = vector.load %arg6[%c0_9, %c0_10] : memref<128x512xbf16, #tpu.memory_space<vmem>>, vector<128x512xbf16>
    %c0_11 = arith.constant 0 : index
    %c0_12 = arith.constant 0 : index
    %12 = vector.load %arg8[%c0_11, %c0_12] : memref<8x128xf32, #tpu.memory_space<vmem>>, vector<8x128xf32>
    %c0_13 = arith.constant 0 : index
    %c0_14 = arith.constant 0 : index
    %13 = vector.load %arg9[%c0_13, %c0_14] : memref<8x128xf32, #tpu.memory_space<vmem>>, vector<8x128xf32>
    %c0_i32_15 = arith.constant 0 : i32
    %c8_i32 = arith.constant 8 : i32
    %14 = arith.muli %c0_i32_15, %c8_i32 : i32
    %15 = tpu.assume_multiple %14, 8 : i32
    %16 = arith.index_cast %15 : i32 to index
    %c0_16 = arith.constant 0 : index
    %17 = vector.load %arg10[%16, %c0_16] : memref<32x512xf32, #tpu.memory_space<vmem>>, vector<8x512xf32>
    %18 = arith.truncf %12 : vector<8x128xf32> to vector<8x128xbf16>
    %cst_17 = arith.constant dense<0.000000e+00> : vector<8x512xf32>
    %19 = tpu.matmul %18, %11, %cst_17 {dimension_numbers = #tpu.dot_dimension_numbers<[1], [0], [0], [1], [0, 0, 1, 1], [], []>} : vector<8x128xbf16>, vector<128x512xbf16>, vector<8x512xf32> -> vector<8x512xf32>
    %20 = arith.addf %17, %19 : vector<8x512xf32>
    %21 = vector.extract_strided_slice %20 {offsets = [0, 0], sizes = [8, 128], strides = [1, 1]} : vector<8x512xf32> to vector<8x128xf32>
    %22 = arith.negf %21 : vector<8x128xf32>
    %23 = math.exp %22 : vector<8x128xf32>
    %cst_18 = arith.constant 1.000000e+00 : f32
    %24 = vector.broadcast %cst_18 : f32 to vector<8x128xf32>
    %25 = arith.addf %24, %23 : vector<8x128xf32>
    %26 = arith.divf %24, %25 : vector<8x128xf32>
    %27 = vector.extract_strided_slice %20 {offsets = [0, 256], sizes = [8, 128], strides = [1, 1]} : vector<8x512xf32> to vector<8x128xf32>
    %28 = math.tanh %27 : vector<8x128xf32>
    %29 = arith.mulf %26, %28 : vector<8x128xf32>
    %30 = vector.extract_strided_slice %20 {offsets = [0, 128], sizes = [8, 128], strides = [1, 1]} : vector<8x512xf32> to vector<8x128xf32>
    %31 = arith.negf %30 : vector<8x128xf32>
    %32 = math.exp %31 : vector<8x128xf32>
    %cst_19 = arith.constant 1.000000e+00 : f32
    %33 = vector.broadcast %cst_19 : f32 to vector<8x128xf32>
    %34 = arith.addf %33, %32 : vector<8x128xf32>
    %35 = arith.divf %33, %34 : vector<8x128xf32>
    %36 = arith.mulf %35, %13 : vector<8x128xf32>
    %37 = arith.addf %36, %29 : vector<8x128xf32>
    %38 = vector.extract_strided_slice %20 {offsets = [0, 384], sizes = [8, 128], strides = [1, 1]} : vector<8x512xf32> to vector<8x128xf32>
    %39 = arith.negf %38 : vector<8x128xf32>
    %40 = math.exp %39 : vector<8x128xf32>
    %cst_20 = arith.constant 1.000000e+00 : f32
    %41 = vector.broadcast %cst_20 : f32 to vector<8x128xf32>
    %42 = arith.addf %41, %40 : vector<8x128xf32>
    %43 = arith.divf %41, %42 : vector<8x128xf32>
    %44 = math.tanh %37 : vector<8x128xf32>
    %45 = arith.mulf %43, %44 : vector<8x128xf32>
    %c1_i32 = arith.constant 1 : i32
    %c8_i32_21 = arith.constant 8 : i32
    %46 = arith.muli %c1_i32, %c8_i32_21 : i32
    %47 = tpu.assume_multiple %46, 8 : i32
    %48 = arith.index_cast %47 : i32 to index
    %c0_22 = arith.constant 0 : index
    %49 = vector.load %arg10[%48, %c0_22] : memref<32x512xf32, #tpu.memory_space<vmem>>, vector<8x512xf32>
    %50 = arith.truncf %45 : vector<8x128xf32> to vector<8x128xbf16>
    %cst_23 = arith.constant dense<0.000000e+00> : vector<8x512xf32>
    %51 = tpu.matmul %50, %11, %cst_23 {dimension_numbers = #tpu.dot_dimension_numbers<[1], [0], [0], [1], [0, 0, 1, 1], [], []>} : vector<8x128xbf16>, vector<128x512xbf16>, vector<8x512xf32> -> vector<8x512xf32>
    %52 = arith.addf %49, %51 : vector<8x512xf32>
    %53 = vector.extract_strided_slice %52 {offsets = [0, 0], sizes = [8, 128], strides = [1, 1]} : vector<8x512xf32> to vector<8x128xf32>
    %54 = arith.negf %53 : vector<8x128xf32>
    %55 = math.exp %54 : vector<8x128xf32>
    %cst_24 = arith.constant 1.000000e+00 : f32
    %56 = vector.broadcast %cst_24 : f32 to vector<8x128xf32>
    %57 = arith.addf %56, %55 : vector<8x128xf32>
    %58 = arith.divf %56, %57 : vector<8x128xf32>
    %59 = vector.extract_strided_slice %52 {offsets = [0, 256], sizes = [8, 128], strides = [1, 1]} : vector<8x512xf32> to vector<8x128xf32>
    %60 = math.tanh %59 : vector<8x128xf32>
    %61 = arith.mulf %58, %60 : vector<8x128xf32>
    %62 = vector.extract_strided_slice %52 {offsets = [0, 128], sizes = [8, 128], strides = [1, 1]} : vector<8x512xf32> to vector<8x128xf32>
    %63 = arith.negf %62 : vector<8x128xf32>
    %64 = math.exp %63 : vector<8x128xf32>
    %cst_25 = arith.constant 1.000000e+00 : f32
    %65 = vector.broadcast %cst_25 : f32 to vector<8x128xf32>
    %66 = arith.addf %65, %64 : vector<8x128xf32>
    %67 = arith.divf %65, %66 : vector<8x128xf32>
    %68 = arith.mulf %67, %37 : vector<8x128xf32>
    %69 = arith.addf %68, %61 : vector<8x128xf32>
    %70 = vector.extract_strided_slice %52 {offsets = [0, 384], sizes = [8, 128], strides = [1, 1]} : vector<8x512xf32> to vector<8x128xf32>
    %71 = arith.negf %70 : vector<8x128xf32>
    %72 = math.exp %71 : vector<8x128xf32>
    %cst_26 = arith.constant 1.000000e+00 : f32
    %73 = vector.broadcast %cst_26 : f32 to vector<8x128xf32>
    %74 = arith.addf %73, %72 : vector<8x128xf32>
    %75 = arith.divf %73, %74 : vector<8x128xf32>
    %76 = math.tanh %69 : vector<8x128xf32>
    %77 = arith.mulf %75, %76 : vector<8x128xf32>
    %c2_i32 = arith.constant 2 : i32
    %c8_i32_27 = arith.constant 8 : i32
    %78 = arith.muli %c2_i32, %c8_i32_27 : i32
    %79 = tpu.assume_multiple %78, 8 : i32
    %80 = arith.index_cast %79 : i32 to index
    %c0_28 = arith.constant 0 : index
    %81 = vector.load %arg10[%80, %c0_28] : memref<32x512xf32, #tpu.memory_space<vmem>>, vector<8x512xf32>
    %82 = arith.truncf %77 : vector<8x128xf32> to vector<8x128xbf16>
    %cst_29 = arith.constant dense<0.000000e+00> : vector<8x512xf32>
    %83 = tpu.matmul %82, %11, %cst_29 {dimension_numbers = #tpu.dot_dimension_numbers<[1], [0], [0], [1], [0, 0, 1, 1], [], []>} : vector<8x128xbf16>, vector<128x512xbf16>, vector<8x512xf32> -> vector<8x512xf32>
    %84 = arith.addf %81, %83 : vector<8x512xf32>
    %85 = vector.extract_strided_slice %84 {offsets = [0, 0], sizes = [8, 128], strides = [1, 1]} : vector<8x512xf32> to vector<8x128xf32>
    %86 = arith.negf %85 : vector<8x128xf32>
    %87 = math.exp %86 : vector<8x128xf32>
    %cst_30 = arith.constant 1.000000e+00 : f32
    %88 = vector.broadcast %cst_30 : f32 to vector<8x128xf32>
    %89 = arith.addf %88, %87 : vector<8x128xf32>
    %90 = arith.divf %88, %89 : vector<8x128xf32>
    %91 = vector.extract_strided_slice %84 {offsets = [0, 256], sizes = [8, 128], strides = [1, 1]} : vector<8x512xf32> to vector<8x128xf32>
    %92 = math.tanh %91 : vector<8x128xf32>
    %93 = arith.mulf %90, %92 : vector<8x128xf32>
    %94 = vector.extract_strided_slice %84 {offsets = [0, 128], sizes = [8, 128], strides = [1, 1]} : vector<8x512xf32> to vector<8x128xf32>
    %95 = arith.negf %94 : vector<8x128xf32>
    %96 = math.exp %95 : vector<8x128xf32>
    %cst_31 = arith.constant 1.000000e+00 : f32
    %97 = vector.broadcast %cst_31 : f32 to vector<8x128xf32>
    %98 = arith.addf %97, %96 : vector<8x128xf32>
    %99 = arith.divf %97, %98 : vector<8x128xf32>
    %100 = arith.mulf %99, %69 : vector<8x128xf32>
    %101 = arith.addf %100, %93 : vector<8x128xf32>
    %102 = vector.extract_strided_slice %84 {offsets = [0, 384], sizes = [8, 128], strides = [1, 1]} : vector<8x512xf32> to vector<8x128xf32>
    %103 = arith.negf %102 : vector<8x128xf32>
    %104 = math.exp %103 : vector<8x128xf32>
    %cst_32 = arith.constant 1.000000e+00 : f32
    %105 = vector.broadcast %cst_32 : f32 to vector<8x128xf32>
    %106 = arith.addf %105, %104 : vector<8x128xf32>
    %107 = arith.divf %105, %106 : vector<8x128xf32>
    %108 = math.tanh %101 : vector<8x128xf32>
    %109 = arith.mulf %107, %108 : vector<8x128xf32>
    %c3_i32 = arith.constant 3 : i32
    %c8_i32_33 = arith.constant 8 : i32
    %110 = arith.muli %c3_i32, %c8_i32_33 : i32
    %111 = tpu.assume_multiple %110, 8 : i32
    %112 = arith.index_cast %111 : i32 to index
    %c0_34 = arith.constant 0 : index
    %113 = vector.load %arg10[%112, %c0_34] : memref<32x512xf32, #tpu.memory_space<vmem>>, vector<8x512xf32>
    %114 = arith.truncf %109 : vector<8x128xf32> to vector<8x128xbf16>
    %cst_35 = arith.constant dense<0.000000e+00> : vector<8x512xf32>
    %115 = tpu.matmul %114, %11, %cst_35 {dimension_numbers = #tpu.dot_dimension_numbers<[1], [0], [0], [1], [0, 0, 1, 1], [], []>} : vector<8x128xbf16>, vector<128x512xbf16>, vector<8x512xf32> -> vector<8x512xf32>
    %116 = arith.addf %113, %115 : vector<8x512xf32>
    %117 = vector.extract_strided_slice %116 {offsets = [0, 0], sizes = [8, 128], strides = [1, 1]} : vector<8x512xf32> to vector<8x128xf32>
    %118 = arith.negf %117 : vector<8x128xf32>
    %119 = math.exp %118 : vector<8x128xf32>
    %cst_36 = arith.constant 1.000000e+00 : f32
    %120 = vector.broadcast %cst_36 : f32 to vector<8x128xf32>
    %121 = arith.addf %120, %119 : vector<8x128xf32>
    %122 = arith.divf %120, %121 : vector<8x128xf32>
    %123 = vector.extract_strided_slice %116 {offsets = [0, 256], sizes = [8, 128], strides = [1, 1]} : vector<8x512xf32> to vector<8x128xf32>
    %124 = math.tanh %123 : vector<8x128xf32>
    %125 = arith.mulf %122, %124 : vector<8x128xf32>
    %126 = vector.extract_strided_slice %116 {offsets = [0, 128], sizes = [8, 128], strides = [1, 1]} : vector<8x512xf32> to vector<8x128xf32>
    %127 = arith.negf %126 : vector<8x128xf32>
    %128 = math.exp %127 : vector<8x128xf32>
    %cst_37 = arith.constant 1.000000e+00 : f32
    %129 = vector.broadcast %cst_37 : f32 to vector<8x128xf32>
    %130 = arith.addf %129, %128 : vector<8x128xf32>
    %131 = arith.divf %129, %130 : vector<8x128xf32>
    %132 = arith.mulf %131, %101 : vector<8x128xf32>
    %133 = arith.addf %132, %125 : vector<8x128xf32>
    %134 = vector.extract_strided_slice %116 {offsets = [0, 384], sizes = [8, 128], strides = [1, 1]} : vector<8x512xf32> to vector<8x128xf32>
    %135 = arith.negf %134 : vector<8x128xf32>
    %136 = math.exp %135 : vector<8x128xf32>
    %cst_38 = arith.constant 1.000000e+00 : f32
    %137 = vector.broadcast %cst_38 : f32 to vector<8x128xf32>
    %138 = arith.addf %137, %136 : vector<8x128xf32>
    %139 = arith.divf %137, %138 : vector<8x128xf32>
    %140 = math.tanh %133 : vector<8x128xf32>
    %141 = arith.mulf %139, %140 : vector<8x128xf32>
    %c4_i32 = arith.constant 4 : i32
    %c0_39 = arith.constant 0 : index
    %c0_40 = arith.constant 0 : index
    %142 = vector.load %arg8[%c0_39, %c0_40] : memref<8x128xf32, #tpu.memory_space<vmem>>, vector<8x128xf32>
    tpu.vector_store %arg8[%c0_39, %c0_40], %141 {strides = array<i32>} : memref<8x128xf32, #tpu.memory_space<vmem>>, vector<8x128xf32>,
    %c0_41 = arith.constant 0 : index
    %c0_42 = arith.constant 0 : index
    %143 = vector.load %arg9[%c0_41, %c0_42] : memref<8x128xf32, #tpu.memory_space<vmem>>, vector<8x128xf32>
    tpu.vector_store %arg9[%c0_41, %c0_42], %133 {strides = array<i32>} : memref<8x128xf32, #tpu.memory_space<vmem>>, vector<8x128xf32>,
    return
  }
  func.func @transform_0(%arg0: i32, %arg1: i32) -> (i32, i32, i32) {
    %c0_i32 = arith.constant 0 : i32
    %c0_i32_0 = arith.constant 0 : i32
    return %arg0, %arg1, %c0_i32 : i32, i32, i32
  }
  func.func @transform_1(%arg0: i32, %arg1: i32) -> (i32, i32) {
    %c0_i32 = arith.constant 0 : i32
    %c0_i32_0 = arith.constant 0 : i32
    return %arg0, %c0_i32 : i32, i32
  }
  func.func @transform_2(%arg0: i32, %arg1: i32) -> (i32, i32) {
    %c0_i32 = arith.constant 0 : i32
    %c0_i32_0 = arith.constant 0 : i32
    return %arg0, %c0_i32 : i32, i32
  }
  func.func @transform_3(%arg0: i32, %arg1: i32) -> (i32, i32) {
    %c0_i32 = arith.constant 0 : i32
    %c0_i32_0 = arith.constant 0 : i32
    %c0_i32_1 = arith.constant 0 : i32
    return %c0_i32, %c0_i32_0 : i32, i32
  }
  func.func @transform_4(%arg0: i32, %arg1: i32) -> (i32, i32) {
    %c0_i32 = arith.constant 0 : i32
    %c0_i32_0 = arith.constant 0 : i32
    %c0_i32_1 = arith.constant 0 : i32
    return %c0_i32, %c0_i32_0 : i32, i32
  }
  func.func @transform_5(%arg0: i32, %arg1: i32) -> (i32, i32) {
    %c0_i32 = arith.constant 0 : i32
    %c0_i32_0 = arith.constant 0 : i32
    %c0_i32_1 = arith.constant 0 : i32
    return %c0_i32, %c0_i32_0 : i32, i32
  }
  func.func @transform_6(%arg0: i32, %arg1: i32) -> (i32, i32) {
    %c0_i32 = arith.constant 0 : i32
    %c0_i32_0 = arith.constant 0 : i32
    return %arg0, %c0_i32 : i32, i32
  }
  func.func @transform_7(%arg0: i32, %arg1: i32) -> (i32, i32) {
    %c0_i32 = arith.constant 0 : i32
    %c0_i32_0 = arith.constant 0 : i32
    return %arg0, %c0_i32 : i32, i32
  }
}

</mosaic_0001>

<llo_original>
// kernel: classifier_forward.1
$region0: #{classifier_forward.1}
  #allocation0 [shape = 'u32[]', space=smem, size = 0x4, offset = 0x4, fixed_abs, tag = 'smem constant byte address 0x4 - core index']
  #allocation1 [shape = 'u32[144,128]{1,0:T(1,128)}', space=vmem, size = 0x12000, scoped, tag = 'internal scratch']
  #allocation2 [shape = 'f32[32,512]{1,0:T(8,128)}', space=vmem, size = 0x10000, scoped, tag = 'scratch operand']
  %s0 = inlined_call_operand.vmem [shape: bf16[1,64,16], index: 0, kind: input, shape index: {}]
  %s1 = inlined_call_operand.vmem [shape: f32[8,128], index: 1, kind: input, shape index: {}]
  %s2 = inlined_call_operand.vmem [shape: f32[8,128], index: 2, kind: input, shape index: {}]
  %s3 = inlined_call_operand.vmem [shape: bf16[16,512], index: 3, kind: input, shape index: {}]
  %s4 = inlined_call_operand.vmem [shape: bf16[128,512], index: 4, kind: input, shape index: {}]
  %s5 = inlined_call_operand.vmem [shape: f32[1,512], index: 5, kind: input, shape index: {}]
  %s6 = inlined_call_operand.vmem [shape: f32[8,128], index: 6, kind: output, shape index: {0}]
  %s7 = inlined_call_operand.vmem [shape: f32[8,128], index: 7, kind: output, shape index: {1}]
  %8 = xla_tuple %s6, %s7
  %s9 = sld [smem:[#allocation0]]
  $region69: #{classifier_forward.1} parent=0
    _
  %s11 = ssub.s32 1, %s9
  %s12 = scalar_select 0, %s11, %s9
  loop: start=0, step=1, limit=4
  $region2: #{classifier_forward.1} parent=0 // loop_pre_header
    _
  $region3: #{classifier_forward.1} parent=0 // loop_header
    %s14 = sphi 0, %s18
    %p15 = scmp.ge.s32.totalorder %s14, 4
    %s21 = sphi 0, %s33
    %s22 = sphi 0, %s29
    %s23 = sphi 0, %s21
    %s24 = sphi 0, %s22
    %s25 = sphi 0, %s23
    %s26 = sphi 0, %s24
    %s38 = sphi 0, %s40
    %s41 = sphi 0, %s38
    %s42 = sphi 0, %s41
    %s58 = sphi 0, %s42
    %s64 = sphi 0, %s66
    %s67 = sphi 0, %s64
    %s68 = sphi 0, %s67
    %s84 = sphi 0, %s68
    %s90 = sphi 0, %s92
    %s93 = sphi 0, %s90
    %s94 = sphi 0, %s93
    %s110 = sphi 0, %s94
    %s114 = sphi 0, %s114
    %s116 = sphi 0, %s114
    %s117 = sphi 0, %s116
    %s131 = sphi 0, %s117
    %s135 = sphi 0, %s135
    %s137 = sphi 0, %s135
    %s138 = sphi 0, %s137
    %s152 = sphi 0, %s138
    %s156 = sphi 0, %s156
    %s158 = sphi 0, %s156
    %s159 = sphi 0, %s158
    %s173 = sphi 0, %s159
    %s179 = sphi 0, %s181
    %s182 = sphi 0, %s179
    %s183 = sphi 0, %s182
    %s199 = sphi 0, %s183
    %s205 = sphi 0, %s207
    %s208 = sphi 0, %s205
    %s209 = sphi 0, %s208
    %s225 = sphi 0, %s209
  $region4: #{classifier_forward.1} parent=0 // loop_header_branch
    %17 = sbr.rel (%p15) target = $region8
  $region5: #{classifier_forward.1} parent=0 // loop_body
    %s19 = ssub.s32 %s14, 1
    %s20 = ssub.s32 %s14, 2
    %s27 = sadd.s32 1, %s22
    %p28 = scmp.ge.s32.totalorder %s27, 2
    %s29 = scalar_select %p28, 0, %s27
    %s30 = sadd.s32 1, %s21
    %s31 = scalar_select %p28, %s30, %s21
    %p32 = scmp.ge.s32.totalorder %s31, 1
    %s33 = scalar_select %p32, 0, %s31
    %s34 = ssub.s32 %s21, %s33
    %s35 = ssub.s32 %s22, %s29
    %s36 = sor.u32 %s34, %s35
    %p37 = scmp.eq.s32.totalorder %s36, 0
    %s39 = sadd.s32 %s38, 1
    %s40 = scalar_select %p37, %s38, %s39
    %p43 = pneg %p37
    %p44 = scmp.eq.s32.totalorder %s14, 1
    %p45 = por %p43, %p44
    %p46 = scmp.ne.s32.totalorder %s38, %s41
    %p47 = scmp.eq.s32.totalorder %s14, 0
    %p48 = por %p46, %p47
    %p49 = scmp.ne.s32.totalorder %s38, %s41
    %p50 = scmp.eq.s32.totalorder %s19, 1
    %p51 = por %p49, %p50
    %p52 = scmp.ne.s32.totalorder %s41, %s42
    %p53 = scmp.eq.s32.totalorder %s19, 0
    %p54 = por %p52, %p53
    %p55 = scmp.ne.s32.totalorder %s41, %s42
    %p56 = scmp.eq.s32.totalorder %s20, 1
    %p57 = por %p55, %p56
    %p59 = scmp.ne.s32.totalorder %s42, %s58
    %p60 = scmp.eq.s32.totalorder %s20, 0
    %p61 = por %p59, %p60
    %s62 = ssub.s32 %s21, %s33
    %p63 = scmp.eq.s32.totalorder %s62, 0
    %s65 = sadd.s32 %s64, 1
    %s66 = scalar_select %p63, %s64, %s65
    %p69 = pneg %p63
    %p70 = scmp.eq.s32.totalorder %s14, 1
    %p71 = por %p69, %p70
    %p72 = scmp.ne.s32.totalorder %s64, %s67
    %p73 = scmp.eq.s32.totalorder %s14, 0
    %p74 = por %p72, %p73
    %p75 = scmp.ne.s32.totalorder %s64, %s67
    %p76 = scmp.eq.s32.totalorder %s19, 1
    %p77 = por %p75, %p76
    %p78 = scmp.ne.s32.totalorder %s67, %s68
    %p79 = scmp.eq.s32.totalorder %s19, 0
    %p80 = por %p78, %p79
    %p81 = scmp.ne.s32.totalorder %s67, %s68
    %p82 = scmp.eq.s32.totalorder %s20, 1
    %p83 = por %p81, %p82
    %p85 = scmp.ne.s32.totalorder %s68, %s84
    %p86 = scmp.eq.s32.totalorder %s20, 0
    %p87 = por %p85, %p86
    %s88 = ssub.s32 %s21, %s33
    %p89 = scmp.eq.s32.totalorder %s88, 0
    %s91 = sadd.s32 %s90, 1
    %s92 = scalar_select %p89, %s90, %s91
    %p95 = pneg %p89
    %p96 = scmp.eq.s32.totalorder %s14, 1
    %p97 = por %p95, %p96
    %p98 = scmp.ne.s32.totalorder %s90, %s93
    %p99 = scmp.eq.s32.totalorder %s14, 0
    %p100 = por %p98, %p99
    %p101 = scmp.ne.s32.totalorder %s90, %s93
    %p102 = scmp.eq.s32.totalorder %s19, 1
    %p103 = por %p101, %p102
    %p104 = scmp.ne.s32.totalorder %s93, %s94
    %p105 = scmp.eq.s32.totalorder %s19, 0
    %p106 = por %p104, %p105
    %p107 = scmp.ne.s32.totalorder %s93, %s94
    %p108 = scmp.eq.s32.totalorder %s20, 1
    %p109 = por %p107, %p108
    %p111 = scmp.ne.s32.totalorder %s94, %s110
    %p112 = scmp.eq.s32.totalorder %s20, 0
    %p113 = por %p111, %p112
    %s115 = sadd.s32 %s114, 1
    %p118 = scmp.eq.s32.totalorder %s14, 1
    %p119 = scmp.ne.s32.totalorder %s114, %s116
    %p120 = scmp.eq.s32.totalorder %s14, 0
    %p121 = por %p119, %p120
    %p122 = scmp.ne.s32.totalorder %s114, %s116
    %p123 = scmp.eq.s32.totalorder %s19, 1
    %p124 = por %p122, %p123
    %p125 = scmp.ne.s32.totalorder %s116, %s117
    %p126 = scmp.eq.s32.totalorder %s19, 0
    %p127 = por %p125, %p126
    %p128 = scmp.ne.s32.totalorder %s116, %s117
    %p129 = scmp.eq.s32.totalorder %s20, 1
    %p130 = por %p128, %p129
    %p132 = scmp.ne.s32.totalorder %s117, %s131
    %p133 = scmp.eq.s32.totalorder %s20, 0
    %p134 = por %p132, %p133
    %s136 = sadd.s32 %s135, 1
    %p139 = scmp.eq.s32.totalorder %s14, 1
    %p140 = scmp.ne.s32.totalorder %s135, %s137
    %p141 = scmp.eq.s32.totalorder %s14, 0
    %p142 = por %p140, %p141
    %p143 = scmp.ne.s32.totalorder %s135, %s137
    %p144 = scmp.eq.s32.totalorder %s19, 1
    %p145 = por %p143, %p144
    %p146 = scmp.ne.s32.totalorder %s137, %s138
    %p147 = scmp.eq.s32.totalorder %s19, 0
    %p148 = por %p146, %p147
    %p149 = scmp.ne.s32.totalorder %s137, %s138
    %p150 = scmp.eq.s32.totalorder %s20, 1
    %p151 = por %p149, %p150
    %p153 = scmp.ne.s32.totalorder %s138, %s152
    %p154 = scmp.eq.s32.totalorder %s20, 0
    %p155 = por %p153, %p154
    %s157 = sadd.s32 %s156, 1
    %p160 = scmp.eq.s32.totalorder %s14, 1
    %p161 = scmp.ne.s32.totalorder %s156, %s158
    %p162 = scmp.eq.s32.totalorder %s14, 0
    %p163 = por %p161, %p162
    %p164 = scmp.ne.s32.totalorder %s156, %s158
    %p165 = scmp.eq.s32.totalorder %s19, 1
    %p166 = por %p164, %p165
    %p167 = scmp.ne.s32.totalorder %s158, %s159
    %p168 = scmp.eq.s32.totalorder %s19, 0
    %p169 = por %p167, %p168
    %p170 = scmp.ne.s32.totalorder %s158, %s159
    %p171 = scmp.eq.s32.totalorder %s20, 1
    %p172 = por %p170, %p171
    %p174 = scmp.ne.s32.totalorder %s159, %s173
    %p175 = scmp.eq.s32.totalorder %s20, 0
    %p176 = por %p174, %p175
    %s177 = ssub.s32 %s21, %s33
    %p178 = scmp.eq.s32.totalorder %s177, 0
    %s180 = sadd.s32 %s179, 1
    %s181 = scalar_select %p178, %s179, %s180
    %p184 = pneg %p178
    %p185 = scmp.eq.s32.totalorder %s14, 1
    %p186 = por %p184, %p185
    %p187 = scmp.ne.s32.totalorder %s179, %s182
    %p188 = scmp.eq.s32.totalorder %s14, 0
    %p189 = por %p187, %p188
    %p190 = scmp.ne.s32.totalorder %s179, %s182
    %p191 = scmp.eq.s32.totalorder %s19, 1
    %p192 = por %p190, %p191
    %p193 = scmp.ne.s32.totalorder %s182, %s183
    %p194 = scmp.eq.s32.totalorder %s19, 0
    %p195 = por %p193, %p194
    %p196 = scmp.ne.s32.totalorder %s182, %s183
    %p197 = scmp.eq.s32.totalorder %s20, 1
    %p198 = por %p196, %p197
    %p200 = scmp.ne.s32.totalorder %s183, %s199
    %p201 = scmp.eq.s32.totalorder %s20, 0
    %p202 = por %p200, %p201
    %s203 = ssub.s32 %s21, %s33
    %p204 = scmp.eq.s32.totalorder %s203, 0
    %s206 = sadd.s32 %s205, 1
    %s207 = scalar_select %p204, %s205, %s206
    %p210 = pneg %p204
    %p211 = scmp.eq.s32.totalorder %s14, 1
    %p212 = por %p210, %p211
    %p213 = scmp.ne.s32.totalorder %s205, %s208
    %p214 = scmp.eq.s32.totalorder %s14, 0
    %p215 = por %p213, %p214
    %p216 = scmp.ne.s32.totalorder %s205, %s208
    %p217 = scmp.eq.s32.totalorder %s19, 1
    %p218 = por %p216, %p217
    %p219 = scmp.ne.s32.totalorder %s208, %s209
    %p220 = scmp.eq.s32.totalorder %s19, 0
    %p221 = por %p219, %p220
    %p222 = scmp.ne.s32.totalorder %s208, %s209
    %p223 = scmp.eq.s32.totalorder %s20, 1
    %p224 = por %p222, %p223
    %p226 = scmp.ne.s32.totalorder %s209, %s225
    %p227 = scmp.eq.s32.totalorder %s20, 0
    %p228 = por %p226, %p227
    %p229 = scmp.le.s32.totalorder 1, %s14
    %p230 = scmp.lt.s32.totalorder %s14, 3
    %p231 = pnand %p229, %p230
    %p232 = pneg %p231
    // Predicated region
    $region9: #{classifier_forward.1} parent=5 // pred_check
      _
    $region10: #{classifier_forward.1} parent=5 // pred_check_branch
      %234 = sbr.rel (%p231) target = $region12
    $region11: #{classifier_forward.1} parent=5 // pred_region
      %s235 = ssub.s32 %s14, 1
      // Predicated region
      $region13: #{classifier_forward.1} parent=11 // pred_check
        %p236 = pneg %p80
      $region14: #{classifier_forward.1} parent=11 // pred_check_branch
        %238 = sbr.rel (%p236) target = $region16
      $region15: #{classifier_forward.1} parent=11 // pred_region
        %p239 = scmp.lt.s32.totalorder %s23, 0
        %s240 = scalar_select %p239, %s23, 0
        %s241 = smul.addr %s240, 8
        %s242 = scalar_lea.vmem %s1, %s241
      $region16: #{classifier_forward.1} parent=11 // pred_fallthru
        _
      // Predicated region
      $region17: #{classifier_forward.1} parent=11 // pred_check
        %p243 = pneg %p106
      $region18: #{classifier_forward.1} parent=11 // pred_check_branch
        %245 = sbr.rel (%p243) target = $region20
      $region19: #{classifier_forward.1} parent=11 // pred_region
        %p246 = scmp.lt.s32.totalorder %s23, 0
        %s247 = scalar_select %p246, %s23, 0
        %s248 = smul.addr %s247, 8
        %s249 = scalar_lea.vmem %s2, %s248
      $region20: #{classifier_forward.1} parent=11 // pred_fallthru
        _
      // Predicated region
      $region21: #{classifier_forward.1} parent=11 // pred_check
        %p250 = pneg %p127
      $region22: #{classifier_forward.1} parent=11 // pred_check_branch
        %252 = sbr.rel (%p250) target = $region24
      $region23: #{classifier_forward.1} parent=11 // pred_region
        _
      $region24: #{classifier_forward.1} parent=11 // pred_fallthru
        _
      // Predicated region
      $region25: #{classifier_forward.1} parent=11 // pred_check
        %p253 = pneg %p148
      $region26: #{classifier_forward.1} parent=11 // pred_check_branch
        %255 = sbr.rel (%p253) target = $region28
      $region27: #{classifier_forward.1} parent=11 // pred_region
        _
      $region28: #{classifier_forward.1} parent=11 // pred_fallthru
        _
      // Predicated region
      $region29: #{classifier_forward.1} parent=11 // pred_check
        %p256 = pneg %p169
      $region30: #{classifier_forward.1} parent=11 // pred_check_branch
        %258 = sbr.rel (%p256) target = $region32
      $region31: #{classifier_forward.1} parent=11 // pred_region
        _
      $region32: #{classifier_forward.1} parent=11 // pred_fallthru
        _
    $region12: #{classifier_forward.1} parent=5 // pred_fallthru
      _
    %p259 = scmp.lt.s32.totalorder %s14, 2
    // Predicated region
    $region33: #{classifier_forward.1} parent=5 // pred_check
      %p260 = pneg %p259
    $region34: #{classifier_forward.1} parent=5 // pred_check_branch
      %262 = sbr.rel (%p260) target = $region36
    $region35: #{classifier_forward.1} parent=5 // pred_region
      // Predicated region
      $region37: #{classifier_forward.1} parent=35 // pred_check
        %p263 = pneg %p48
      $region38: #{classifier_forward.1} parent=35 // pred_check_branch
        %265 = sbr.rel (%p263) target = $region40
      $region39: #{classifier_forward.1} parent=35 // pred_region
        %s266 = smul.u32 4, %s22
        %p267 = scmp.lt.s32.totalorder %s21, 0
        %s268 = scalar_select %p267, %s21, 0
        %p269 = scmp.lt.s32.totalorder %s266, 7
        %s270 = scalar_select %p269, %s266, 7
        %s271 = smul.addr %s268, 8
        %s272 = sadd.s32 %s270, %s271
        %s273 = smul.addr %s272, 4
        %s274 = scalar_lea.vmem %s0, %s273
        %s275 = smul.u32 4, %s22
      $region40: #{classifier_forward.1} parent=35 // pred_fallthru
        _
    $region36: #{classifier_forward.1} parent=5 // pred_fallthru
      _
    %p276 = scmp.le.s32.totalorder 1, %s14
    %p277 = scmp.lt.s32.totalorder %s14, 3
    %p278 = pnand %p276, %p277
    %p279 = pneg %p278
    // Predicated region
    $region41: #{classifier_forward.1} parent=5 // pred_check
      _
    $region42: #{classifier_forward.1} parent=5 // pred_check_branch
      %281 = sbr.rel (%p278) target = $region44
    $region43: #{classifier_forward.1} parent=5 // pred_region
      %s282 = ssub.s32 %s14, 1
      %s283 = smul.u32 4, %s24
      %p284 = scmp.lt.s32.totalorder %s23, 0
      %s285 = scalar_select %p284, %s23, 0
      %p286 = scmp.lt.s32.totalorder %s283, 7
      %s287 = scalar_select %p286, %s283, 7
      %s288 = smul.addr %s285, 8
      %s289 = sadd.s32 %s287, %s288
      %s290 = smul.addr %s289, 4
      %s291 = scalar_lea.vmem %s0, %s290
      %p292 = pneg %p54
      %p293 = pneg %p51
      %p294 = scmp.lt.s32.totalorder %s23, 0
      %s295 = scalar_select %p294, %s23, 0
      %s296 = smul.addr %s295, 8
      %s297 = scalar_lea.vmem %s1, %s296
      %p298 = pneg %p80
      %p299 = pneg %p77
      %p300 = scmp.lt.s32.totalorder %s23, 0
      %s301 = scalar_select %p300, %s23, 0
      %s302 = smul.addr %s301, 8
      %s303 = scalar_lea.vmem %s2, %s302
      %p304 = pneg %p106
      %p305 = pneg %p103
      %p306 = pneg %p127
      %p307 = pneg %p124
      %p308 = pneg %p148
      %p309 = pneg %p145
      %p310 = pneg %p169
      %p311 = pneg %p166
      %p312 = pneg %p195
      %p313 = pneg %p192
      %p314 = scmp.lt.s32.totalorder %s23, 0
      %s315 = scalar_select %p314, %s23, 0
      %s316 = smul.addr %s315, 8
      %s317 = scalar_lea.vmem %s6, %s316
      %p318 = pneg %p221
      %p319 = pneg %p218
      %p320 = scmp.lt.s32.totalorder %s23, 0
      %s321 = scalar_select %p320, %s23, 0
      %s322 = smul.addr %s321, 8
      %s323 = scalar_lea.vmem %s7, %s322
      %s324 = smul.u32 4, %s24
      %p325 = scmp.lt.s32.totalorder %s23, 0
      %s326 = scalar_select %p325, %s23, 0
      %p327 = scmp.lt.s32.totalorder %s324, 7
      %s328 = scalar_select %p327, %s324, 7
      %s329 = smul.addr %s326, 8
      %s330 = sadd.s32 %s328, %s329
      %s331 = smul.addr %s330, 4
      %s332 = scalar_lea.vmem %s0, %s331
      %s333 = smul.u32 4, %s24
      %p334 = scmp.lt.s32.totalorder %s23, 0
      %s335 = scalar_select %p334, %s23, 0
      %s336 = smul.addr %s335, 8
      %s337 = scalar_lea.vmem %s1, %s336
      %p338 = scmp.lt.s32.totalorder %s23, 0
      %s339 = scalar_select %p338, %s23, 0
      %s340 = smul.addr %s339, 8
      %s341 = scalar_lea.vmem %s2, %s340
      %p342 = scmp.lt.s32.totalorder %s23, 0
      %s343 = scalar_select %p342, %s23, 0
      %s344 = smul.addr %s343, 8
      %s345 = scalar_lea.vmem %s6, %s344
      %p346 = scmp.lt.s32.totalorder %s23, 0
      %s347 = scalar_select %p346, %s23, 0
      %s348 = smul.addr %s347, 8
      %s349 = scalar_lea.vmem %s7, %s348
      %p351 = scmp.eq.s32.totalorder %s24, 0
      // Predicated region
      $region45: #{classifier_forward.1} parent=43 // pred_check
        %p352 = pneg %p351
      $region46: #{classifier_forward.1} parent=43 // pred_check_branch
        %354 = sbr.rel (%p352) target = $region48
      $region47: #{classifier_forward.1} parent=43 // pred_region
        %v355 = vld [vmem:[%s337] sm:$0xff]
        %356 = vst [vmem:[%s345] sm:$0xff] %v355
        %v357 = vld [vmem:[%s341] sm:$0xff]
        %358 = vst [vmem:[%s349] sm:$0xff] %v357
      $region48: #{classifier_forward.1} parent=43 // pred_fallthru
        _
      %v359 = vld [vmem:[%s332] sm:$0xf]
      %v360 = vld [vmem:[%s332 + $0x4] sm:$0xf]
      %v361 = vld [vmem:[%s332 + $0x8] sm:$0xf]
      %v362 = vld [vmem:[%s332 + $0xc] sm:$0xf]
      %v363 = vld [vmem:[%s3] sm:$0xff]
      %v364 = vld [vmem:[%s3 + $0x8] sm:$0xff]
      %v365 = vld [vmem:[%s3 + $0x10] sm:$0xff]
      %v366 = vld [vmem:[%s3 + $0x18] sm:$0xff]
      %v367 = vld [vmem:[%s5] sm:$0xf]
      %v369 = vlaneseq
      %v370 = vshrl.u32 %v369, 7
      %v371 = vsub.s32 0, %v370
      %v372 = vrot.slane %v367, %v371
      %v373 = vlaneseq
      %v374 = vshrl.u32 %v373, 7
      %v375 = vsub.s32 1, %v374
      %v376 = vrot.slane %v367, %v375
      %v377 = vlaneseq
      %v378 = vshrl.u32 %v377, 7
      %v379 = vsub.s32 2, %v378
      %v380 = vrot.slane %v367, %v379
      %v381 = vlaneseq
      %v382 = vshrl.u32 %v381, 7
      %v383 = vsub.s32 3, %v382
      %v384 = vrot.slane %v367, %v383
      %v393 = vunpack.c.l.b16 %v359
      %v394 = vunpack.c.l.b16 %v360
      %v395 = vunpack.c.l.b16 %v361
      %v396 = vunpack.c.l.b16 %v362
      %v397 = vpack.c.b16 %v394, %v393
      %v398 = vpack.c.b16 %v396, %v395
      %v403 = vunpack.c.l.b16 %v363
      %v404 = vunpack.c.h.b16 %v363
      %v405 = vunpack.c.l.b16 %v364
      %v406 = vunpack.c.h.b16 %v364
      %v407 = vunpack.c.l.b16 %v365
      %v408 = vunpack.c.h.b16 %v365
      %v409 = vunpack.c.l.b16 %v366
      %v410 = vunpack.c.h.b16 %v366
      %v411 = vpack.c.b16 %v407, %v403
      %v412 = vpack.c.b16 %v408, %v404
      %v413 = vpack.c.b16 %v409, %v405
      %v414 = vpack.c.b16 %v410, %v406
      %vm419 = vcmask 130048
      %v421 = vsel %vm419, %v397, 0
      %v424 = vsel %vm419, %v398, 0
      %426 = vmatprep.subr.bf16.mxu0 0
      %427 = vmatpush1.bf16.msra.mxu0 0
      %428 = vmatprep.subr.bf16.mxu0 0
      %429 = vmatpush1.bf16.msra.mxu0 0
      %430 = vmatprep.subr.bf16.mxu0 0
      %431 = vmatpush1.bf16.msra.mxu0 0
      %432 = vmatprep.subr.bf16.mxu0 0
      %433 = vmatpush1.bf16.msra.mxu0 0
      %434 = vmatprep.subr.bf16.mxu0 0
      %435 = vmatpush1.bf16.msra.mxu0 0
      %436 = vmatprep.subr.bf16.mxu0 0
      %437 = vmatpush1.bf16.msra.mxu0 0
      %438 = vmatprep.subr.bf16.mxu0 0
      %439 = vmatpush1.bf16.msra.mxu0 0
      %440 = vmatprep.subr.bf16.mxu0 %v412
      %441 = vmatpush1.bf16.msra.mxu0 %v411
      %442 = vmatprep.subr.bf16.mxu0 0
      %443 = vmatpush2.bf16.msra.mxu0 0
      %444 = vmatprep.subr.bf16.mxu0 0
      %445 = vmatpush2.bf16.msra.mxu0 0
      %446 = vmatprep.subr.bf16.mxu0 0
      %447 = vmatpush2.bf16.msra.mxu0 0
      %448 = vmatprep.subr.bf16.mxu0 0
      %449 = vmatpush2.bf16.msra.mxu0 0
      %450 = vmatprep.subr.bf16.mxu0 0
      %451 = vmatpush2.bf16.msra.mxu0 0
      %452 = vmatprep.subr.bf16.mxu0 0
      %453 = vmatpush2.bf16.msra.mxu0 0
      %454 = vmatprep.subr.bf16.mxu0 0
      %455 = vmatpush2.bf16.msra.mxu0 0
      %456 = vmatprep.subr.bf16.mxu0 0
      %457 = vmatpush2.bf16.msra.mxu0 0
      %458 = vmatprep.mubr.bf16.mxu0 0
      %459 = vmatmul.mubr.bf16.gmra.mxu0 %v421
      %v460 = vpop.f32.mrf.mxu0
      %v461 = vadd.f32 %v372, %v460
      %v462 = vpop.f32.mrf.mxu0
      %v463 = vadd.f32 %v376, %v462
      %v464 = vpop.f32.mrf.mxu0
      %v465 = vadd.f32 %v372, %v464
      %v466 = vpop.f32.mrf.mxu0
      %v467 = vadd.f32 %v376, %v466
      %468 = vmatprep.mubr.bf16.mxu0 0
      %469 = vmatmul.mubr.bf16.gmra.mxu0 %v424
      %v470 = vpop.f32.mrf.mxu0
      %v471 = vadd.f32 %v372, %v470
      %v472 = vpop.f32.mrf.mxu0
      %v473 = vadd.f32 %v376, %v472
      %v474 = vpop.f32.mrf.mxu0
      %v475 = vadd.f32 %v372, %v474
      %v476 = vpop.f32.mrf.mxu0
      %v477 = vadd.f32 %v376, %v476
      %478 = vdwg.mxu0
      %479 = vmatprep.subr.bf16.mxu0 0
      %480 = vmatpush1.bf16.msra.mxu0 0
      %481 = vmatprep.subr.bf16.mxu0 0
      %482 = vmatpush1.bf16.msra.mxu0 0
      %483 = vmatprep.subr.bf16.mxu0 0
      %484 = vmatpush1.bf16.msra.mxu0 0
      %485 = vmatprep.subr.bf16.mxu0 0
      %486 = vmatpush1.bf16.msra.mxu0 0
      %487 = vmatprep.subr.bf16.mxu0 0
      %488 = vmatpush1.bf16.msra.mxu0 0
      %489 = vmatprep.subr.bf16.mxu0 0
      %490 = vmatpush1.bf16.msra.mxu0 0
      %491 = vmatprep.subr.bf16.mxu0 0
      %492 = vmatpush1.bf16.msra.mxu0 0
      %493 = vmatprep.subr.bf16.mxu0 %v414
      %494 = vmatpush1.bf16.msra.mxu0 %v413
      %495 = vmatprep.subr.bf16.mxu0 0
      %496 = vmatpush2.bf16.msra.mxu0 0
      %497 = vmatprep.subr.bf16.mxu0 0
      %498 = vmatpush2.bf16.msra.mxu0 0
      %499 = vmatprep.subr.bf16.mxu0 0
      %500 = vmatpush2.bf16.msra.mxu0 0
      %501 = vmatprep.subr.bf16.mxu0 0
      %502 = vmatpush2.bf16.msra.mxu0 0
      %503 = vmatprep.subr.bf16.mxu0 0
      %504 = vmatpush2.bf16.msra.mxu0 0
      %505 = vmatprep.subr.bf16.mxu0 0
      %506 = vmatpush2.bf16.msra.mxu0 0
      %507 = vmatprep.subr.bf16.mxu0 0
      %508 = vmatpush2.bf16.msra.mxu0 0
      %509 = vmatprep.subr.bf16.mxu0 0
      %510 = vmatpush2.bf16.msra.mxu0 0
      %511 = vmatprep.mubr.bf16.mxu0 0
      %512 = vmatmul.mubr.bf16.gmra.mxu0 %v421
      %v513 = vpop.f32.mrf.mxu0
      %v514 = vadd.f32 %v380, %v513
      %v515 = vpop.f32.mrf.mxu0
      %v516 = vadd.f32 %v384, %v515
      %v517 = vpop.f32.mrf.mxu0
      %v518 = vadd.f32 %v380, %v517
      %v519 = vpop.f32.mrf.mxu0
      %v520 = vadd.f32 %v384, %v519
      %521 = vmatprep.mubr.bf16.mxu0 0
      %522 = vmatmul.mubr.bf16.gmra.mxu0 %v424
      %v523 = vpop.f32.mrf.mxu0
      %v524 = vadd.f32 %v380, %v523
      %v525 = vpop.f32.mrf.mxu0
      %v526 = vadd.f32 %v384, %v525
      %v527 = vpop.f32.mrf.mxu0
      %v528 = vadd.f32 %v380, %v527
      %v529 = vpop.f32.mrf.mxu0
      %v530 = vadd.f32 %v384, %v529
      %531 = vdwg.mxu0
      %532 = vst [vmem:[#allocation2] sm:$0xff] %v461
      %533 = vst [vmem:[#allocation2 + $0x8] sm:$0xff] %v463
      %534 = vst [vmem:[#allocation2 + $0x10] sm:$0xff] %v514
      %535 = vst [vmem:[#allocation2 + $0x18] sm:$0xff] %v516
      %536 = vst [vmem:[#allocation2 + $0x20] sm:$0xff] %v465
      %537 = vst [vmem:[#allocation2 + $0x28] sm:$0xff] %v467
      %538 = vst [vmem:[#allocation2 + $0x30] sm:$0xff] %v518
      %539 = vst [vmem:[#allocation2 + $0x38] sm:$0xff] %v520
      %540 = vst [vmem:[#allocation2 + $0x40] sm:$0xff] %v471
      %541 = vst [vmem:[#allocation2 + $0x48] sm:$0xff] %v473
      %542 = vst [vmem:[#allocation2 + $0x50] sm:$0xff] %v524
      %543 = vst [vmem:[#allocation2 + $0x58] sm:$0xff] %v526
      %544 = vst [vmem:[#allocation2 + $0x60] sm:$0xff] %v475
      %545 = vst [vmem:[#allocation2 + $0x68] sm:$0xff] %v477
      %546 = vst [vmem:[#allocation2 + $0x70] sm:$0xff] %v528
      %547 = vst [vmem:[#allocation2 + $0x78] sm:$0xff] %v530
      %v548 = vld [vmem:[%s4] sm:$0xff]
      %v549 = vld [vmem:[%s4 + $0x8] sm:$0xff]
      %v550 = vld [vmem:[%s4 + $0x10] sm:$0xff]
      %v551 = vld [vmem:[%s4 + $0x18] sm:$0xff]
      %v552 = vld [vmem:[%s4 + $0x20] sm:$0xff]
      %v553 = vld [vmem:[%s4 + $0x28] sm:$0xff]
      %v554 = vld [vmem:[%s4 + $0x30] sm:$0xff]
      %v555 = vld [vmem:[%s4 + $0x38] sm:$0xff]
      %v556 = vld [vmem:[%s4 + $0x40] sm:$0xff]
      %v557 = vld [vmem:[%s4 + $0x48] sm:$0xff]
      %v558 = vld [vmem:[%s4 + $0x50] sm:$0xff]
      %v559 = vld [vmem:[%s4 + $0x58] sm:$0xff]
      %v560 = vld [vmem:[%s4 + $0x60] sm:$0xff]
      %v561 = vld [vmem:[%s4 + $0x68] sm:$0xff]
      %v562 = vld [vmem:[%s4 + $0x70] sm:$0xff]
      %v563 = vld [vmem:[%s4 + $0x78] sm:$0xff]
      %v564 = vld [vmem:[%s4 + $0x80] sm:$0xff]
      %v565 = vld [vmem:[%s4 + $0x88] sm:$0xff]
      %v566 = vld [vmem:[%s4 + $0x90] sm:$0xff]
      %v567 = vld [vmem:[%s4 + $0x98] sm:$0xff]
      %v568 = vld [vmem:[%s4 + $0xa0] sm:$0xff]
      %v569 = vld [vmem:[%s4 + $0xa8] sm:$0xff]
      %v570 = vld [vmem:[%s4 + $0xb0] sm:$0xff]
      %v571 = vld [vmem:[%s4 + $0xb8] sm:$0xff]
      %v572 = vld [vmem:[%s4 + $0xc0] sm:$0xff]
      %v573 = vld [vmem:[%s4 + $0xc8] sm:$0xff]
      %v574 = vld [vmem:[%s4 + $0xd0] sm:$0xff]
      %v575 = vld [vmem:[%s4 + $0xd8] sm:$0xff]
      %v576 = vld [vmem:[%s4 + $0xe0] sm:$0xff]
      %v577 = vld [vmem:[%s4 + $0xe8] sm:$0xff]
      %v578 = vld [vmem:[%s4 + $0xf0] sm:$0xff]
      %v579 = vld [vmem:[%s4 + $0xf8] sm:$0xff]
      %v580 = vld [vmem:[%s345] sm:$0xff]
      %v581 = vld [vmem:[%s349] sm:$0xff]
      %s582 = smul.u32 0, 4
      %s583 = smul.addr %s582, 8
      %s584 = scalar_lea.vmem [#allocation2], %s583
      %v585 = vld [vmem:[%s584] sm:$0xff]
      %v586 = vld [vmem:[%s584 + $0x8] sm:$0xff]
      %v587 = vld [vmem:[%s584 + $0x10] sm:$0xff]
      %v588 = vld [vmem:[%s584 + $0x18] sm:$0xff]
      %v589 = vpack.c.bf16 %v580, %v580
      %v622 = vunpack.c.l.b16 %v548
      %v623 = vunpack.c.h.b16 %v548
      %v624 = vunpack.c.l.b16 %v549
      %v625 = vunpack.c.h.b16 %v549
      %v626 = vunpack.c.l.b16 %v550
      %v627 = vunpack.c.h.b16 %v550
      %v628 = vunpack.c.l.b16 %v551
      %v629 = vunpack.c.h.b16 %v551
      %v630 = vunpack.c.l.b16 %v552
      %v631 = vunpack.c.h.b16 %v552
      %v632 = vunpack.c.l.b16 %v553
      %v633 = vunpack.c.h.b16 %v553
      %v634 = vunpack.c.l.b16 %v554
      %v635 = vunpack.c.h.b16 %v554
      %v636 = vunpack.c.l.b16 %v555
      %v637 = vunpack.c.h.b16 %v555
      %v638 = vunpack.c.l.b16 %v556
      %v639 = vunpack.c.h.b16 %v556
      %v640 = vunpack.c.l.b16 %v557
      %v641 = vunpack.c.h.b16 %v557
      %v642 = vunpack.c.l.b16 %v558
      %v643 = vunpack.c.h.b16 %v558
      %v644 = vunpack.c.l.b16 %v559
      %v645 = vunpack.c.h.b16 %v559
      %v646 = vunpack.c.l.b16 %v560
      %v647 = vunpack.c.h.b16 %v560
      %v648 = vunpack.c.l.b16 %v561
      %v649 = vunpack.c.h.b16 %v561
      %v650 = vunpack.c.l.b16 %v562
      %v651 = vunpack.c.h.b16 %v562
      %v652 = vunpack.c.l.b16 %v563
      %v653 = vunpack.c.h.b16 %v563
      %v654 = vunpack.c.l.b16 %v564
      %v655 = vunpack.c.h.b16 %v564
      %v656 = vunpack.c.l.b16 %v565
      %v657 = vunpack.c.h.b16 %v565
      %v658 = vunpack.c.l.b16 %v566
      %v659 = vunpack.c.h.b16 %v566
      %v660 = vunpack.c.l.b16 %v567
      %v661 = vunpack.c.h.b16 %v567
      %v662 = vunpack.c.l.b16 %v568
      %v663 = vunpack.c.h.b16 %v568
      %v664 = vunpack.c.l.b16 %v569
      %v665 = vunpack.c.h.b16 %v569
      %v666 = vunpack.c.l.b16 %v570
      %v667 = vunpack.c.h.b16 %v570
      %v668 = vunpack.c.l.b16 %v571
      %v669 = vunpack.c.h.b16 %v571
      %v670 = vunpack.c.l.b16 %v572
      %v671 = vunpack.c.h.b16 %v572
      %v672 = vunpack.c.l.b16 %v573
      %v673 = vunpack.c.h.b16 %v573
      %v674 = vunpack.c.l.b16 %v574
      %v675 = vunpack.c.h.b16 %v574
      %v676 = vunpack.c.l.b16 %v575
      %v677 = vunpack.c.h.b16 %v575
      %v678 = vunpack.c.l.b16 %v576
      %v679 = vunpack.c.h.b16 %v576
      %v680 = vunpack.c.l.b16 %v577
      %v681 = vunpack.c.h.b16 %v577
      %v682 = vunpack.c.l.b16 %v578
      %v683 = vunpack.c.h.b16 %v578
      %v684 = vunpack.c.l.b16 %v579
      %v685 = vunpack.c.h.b16 %v579
      %v686 = vpack.c.b16 %v626, %v622
      %v687 = vpack.c.b16 %v627, %v623
      %v688 = vpack.c.b16 %v628, %v624
      %v689 = vpack.c.b16 %v629, %v625
      %v690 = vpack.c.b16 %v634, %v630
      %v691 = vpack.c.b16 %v635, %v631
      %v692 = vpack.c.b16 %v636, %v632
      %v693 = vpack.c.b16 %v637, %v633
      %v694 = vpack.c.b16 %v642, %v638
      %v695 = vpack.c.b16 %v643, %v639
      %v696 = vpack.c.b16 %v644, %v640
      %v697 = vpack.c.b16 %v645, %v641
      %v698 = vpack.c.b16 %v650, %v646
      %v699 = vpack.c.b16 %v651, %v647
      %v700 = vpack.c.b16 %v652, %v648
      %v701 = vpack.c.b16 %v653, %v649
      %v702 = vpack.c.b16 %v658, %v654
      %v703 = vpack.c.b16 %v659, %v655
      %v704 = vpack.c.b16 %v660, %v656
      %v705 = vpack.c.b16 %v661, %v657
      %v706 = vpack.c.b16 %v666, %v662
      %v707 = vpack.c.b16 %v667, %v663
      %v708 = vpack.c.b16 %v668, %v664
      %v709 = vpack.c.b16 %v669, %v665
      %v710 = vpack.c.b16 %v674, %v670
      %v711 = vpack.c.b16 %v675, %v671
      %v712 = vpack.c.b16 %v676, %v672
      %v713 = vpack.c.b16 %v677, %v673
      %v714 = vpack.c.b16 %v682, %v678
      %v715 = vpack.c.b16 %v683, %v679
      %v716 = vpack.c.b16 %v684, %v680
      %v717 = vpack.c.b16 %v685, %v681
      %750 = vmatprep.subr.bf16.mxu0 %v715
      %751 = vmatpush1.bf16.msra.mxu0 %v714
      %752 = vmatprep.subr.bf16.mxu0 %v711
      %753 = vmatpush1.bf16.msra.mxu0 %v710
      %754 = vmatprep.subr.bf16.mxu0 %v707
      %755 = vmatpush1.bf16.msra.mxu0 %v706
      %756 = vmatprep.subr.bf16.mxu0 %v703
      %757 = vmatpush1.bf16.msra.mxu0 %v702
      %758 = vmatprep.subr.bf16.mxu0 %v699
      %759 = vmatpush1.bf16.msra.mxu0 %v698
      %760 = vmatprep.subr.bf16.mxu0 %v695
      %761 = vmatpush1.bf16.msra.mxu0 %v694
      %762 = vmatprep.subr.bf16.mxu0 %v691
      %763 = vmatpush1.bf16.msra.mxu0 %v690
      %764 = vmatprep.subr.bf16.mxu0 %v687
      %765 = vmatpush1.bf16.msra.mxu0 %v686
      %766 = vmatprep.subr.bf16.mxu0 0
      %767 = vmatpush2.bf16.msra.mxu0 0
      %768 = vmatprep.subr.bf16.mxu0 0
      %769 = vmatpush2.bf16.msra.mxu0 0
      %770 = vmatprep.subr.bf16.mxu0 0
      %771 = vmatpush2.bf16.msra.mxu0 0
      %772 = vmatprep.subr.bf16.mxu0 0
      %773 = vmatpush2.bf16.msra.mxu0 0
      %774 = vmatprep.subr.bf16.mxu0 0
      %775 = vmatpush2.bf16.msra.mxu0 0
      %776 = vmatprep.subr.bf16.mxu0 0
      %777 = vmatpush2.bf16.msra.mxu0 0
      %778 = vmatprep.subr.bf16.mxu0 0
      %779 = vmatpush2.bf16.msra.mxu0 0
      %780 = vmatprep.subr.bf16.mxu0 0
      %781 = vmatpush2.bf16.msra.mxu0 0
      %782 = vmatprep.mubr.bf16.mxu0 0
      %783 = vmatmul.mubr.bf16.gmra.mxu0 %v589
      %v784 = vpop.f32.mrf.mxu0
      %v785 = vadd.f32 0.0, %v784
      %v786 = vpop.f32.mrf.mxu0
      %v787 = vadd.f32 0.0, %v786
      %v788 = vpop.f32.mrf.mxu0
      %v789 = vpop.f32.mrf.mxu0
      %790 = vdwg.mxu0
      %791 = vmatprep.subr.bf16.mxu0 %v717
      %792 = vmatpush1.bf16.msra.mxu0 %v716
      %793 = vmatprep.subr.bf16.mxu0 %v713
      %794 = vmatpush1.bf16.msra.mxu0 %v712
      %795 = vmatprep.subr.bf16.mxu0 %v709
      %796 = vmatpush1.bf16.msra.mxu0 %v708
      %797 = vmatprep.subr.bf16.mxu0 %v705
      %798 = vmatpush1.bf16.msra.mxu0 %v704
      %799 = vmatprep.subr.bf16.mxu0 %v701
      %800 = vmatpush1.bf16.msra.mxu0 %v700
      %801 = vmatprep.subr.bf16.mxu0 %v697
      %802 = vmatpush1.bf16.msra.mxu0 %v696
      %803 = vmatprep.subr.bf16.mxu0 %v693
      %804 = vmatpush1.bf16.msra.mxu0 %v692
      %805 = vmatprep.subr.bf16.mxu0 %v689
      %806 = vmatpush1.bf16.msra.mxu0 %v688
      %807 = vmatprep.subr.bf16.mxu0 0
      %808 = vmatpush2.bf16.msra.mxu0 0
      %809 = vmatprep.subr.bf16.mxu0 0
      %810 = vmatpush2.bf16.msra.mxu0 0
      %811 = vmatprep.subr.bf16.mxu0 0
      %812 = vmatpush2.bf16.msra.mxu0 0
      %813 = vmatprep.subr.bf16.mxu0 0
      %814 = vmatpush2.bf16.msra.mxu0 0
      %815 = vmatprep.subr.bf16.mxu0 0
      %816 = vmatpush2.bf16.msra.mxu0 0
      %817 = vmatprep.subr.bf16.mxu0 0
      %818 = vmatpush2.bf16.msra.mxu0 0
      %819 = vmatprep.subr.bf16.mxu0 0
      %820 = vmatpush2.bf16.msra.mxu0 0
      %821 = vmatprep.subr.bf16.mxu0 0
      %822 = vmatpush2.bf16.msra.mxu0 0
      %823 = vmatprep.mubr.bf16.mxu0 0
      %824 = vmatmul.mubr.bf16.gmra.mxu0 %v589
      %v825 = vpop.f32.mrf.mxu0
      %v826 = vadd.f32 0.0, %v825
      %v827 = vpop.f32.mrf.mxu0
      %v828 = vadd.f32 0.0, %v827
      %v829 = vpop.f32.mrf.mxu0
      %v830 = vpop.f32.mrf.mxu0
      %831 = vdwg.mxu0
      %v832 = vadd.f32 %v585, %v785
      %v833 = vadd.f32 %v586, %v787
      %v834 = vadd.f32 %v587, %v826
      %v835 = vadd.f32 %v588, %v828
      %v836 = vxor.u32 %v832, 2147483648
      %v837 = vmul.f32 %v836, 1.442695
      %v838 = vpow.pop %v837
      %v839 = vadd.f32 %v838, 1.0
      %v840 = vrcp.pop %v839
      %v841 = vmul.f32 1.0, %v840
      %v842 = vtanh.pop %v834
      %v843 = vmul.f32 %v841, %v842
      %v844 = vxor.u32 %v833, 2147483648
      %v845 = vmul.f32 %v844, 1.442695
      %v846 = vpow.pop %v845
      %v847 = vadd.f32 %v846, 1.0
      %v848 = vrcp.pop %v847
      %v849 = vmul.f32 1.0, %v848
      %v850 = vmul.f32 %v849, %v581
      %v851 = vadd.f32 %v850, %v843
      %v852 = vxor.u32 %v835, 2147483648
      %v853 = vmul.f32 %v852, 1.442695
      %v854 = vpow.pop %v853
      %v855 = vadd.f32 %v854, 1.0
      %v856 = vrcp.pop %v855
      %v857 = vmul.f32 1.0, %v856
      %v858 = vtanh.pop %v851
      %v859 = vmul.f32 %v857, %v858
      %s860 = smul.u32 1, 4
      %s861 = smul.addr %s860, 8
      %s862 = scalar_lea.vmem [#allocation2], %s861
      %v863 = vld [vmem:[%s862] sm:$0xff]
      %v864 = vld [vmem:[%s862 + $0x8] sm:$0xff]
      %v865 = vld [vmem:[%s862 + $0x10] sm:$0xff]
      %v866 = vld [vmem:[%s862 + $0x18] sm:$0xff]
      %v867 = vpack.c.bf16 %v859, %v859
      %868 = vmatprep.subr.bf16.mxu0 %v715
      %869 = vmatpush1.bf16.msra.mxu0 %v714
      %870 = vmatprep.subr.bf16.mxu0 %v711
      %871 = vmatpush1.bf16.msra.mxu0 %v710
      %872 = vmatprep.subr.bf16.mxu0 %v707
      %873 = vmatpush1.bf16.msra.mxu0 %v706
      %874 = vmatprep.subr.bf16.mxu0 %v703
      %875 = vmatpush1.bf16.msra.mxu0 %v702
      %876 = vmatprep.subr.bf16.mxu0 %v699
      %877 = vmatpush1.bf16.msra.mxu0 %v698
      %878 = vmatprep.subr.bf16.mxu0 %v695
      %879 = vmatpush1.bf16.msra.mxu0 %v694
      %880 = vmatprep.subr.bf16.mxu0 %v691
      %881 = vmatpush1.bf16.msra.mxu0 %v690
      %882 = vmatprep.subr.bf16.mxu0 %v687
      %883 = vmatpush1.bf16.msra.mxu0 %v686
      %884 = vmatprep.subr.bf16.mxu0 0
      %885 = vmatpush2.bf16.msra.mxu0 0
      %886 = vmatprep.subr.bf16.mxu0 0
      %887 = vmatpush2.bf16.msra.mxu0 0
      %888 = vmatprep.subr.bf16.mxu0 0
      %889 = vmatpush2.bf16.msra.mxu0 0
      %890 = vmatprep.subr.bf16.mxu0 0
      %891 = vmatpush2.bf16.msra.mxu0 0
      %892 = vmatprep.subr.bf16.mxu0 0
      %893 = vmatpush2.bf16.msra.mxu0 0
      %894 = vmatprep.subr.bf16.mxu0 0
      %895 = vmatpush2.bf16.msra.mxu0 0
      %896 = vmatprep.subr.bf16.mxu0 0
      %897 = vmatpush2.bf16.msra.mxu0 0
      %898 = vmatprep.subr.bf16.mxu0 0
      %899 = vmatpush2.bf16.msra.mxu0 0
      %900 = vmatprep.mubr.bf16.mxu0 0
      %901 = vmatmul.mubr.bf16.gmra.mxu0 %v867
      %v902 = vpop.f32.mrf.mxu0
      %v903 = vadd.f32 0.0, %v902
      %v904 = vpop.f32.mrf.mxu0
      %v905 = vadd.f32 0.0, %v904
      %v906 = vpop.f32.mrf.mxu0
      %v907 = vpop.f32.mrf.mxu0
      %908 = vdwg.mxu0
      %909 = vmatprep.subr.bf16.mxu0 %v717
      %910 = vmatpush1.bf16.msra.mxu0 %v716
      %911 = vmatprep.subr.bf16.mxu0 %v713
      %912 = vmatpush1.bf16.msra.mxu0 %v712
      %913 = vmatprep.subr.bf16.mxu0 %v709
      %914 = vmatpush1.bf16.msra.mxu0 %v708
      %915 = vmatprep.subr.bf16.mxu0 %v705
      %916 = vmatpush1.bf16.msra.mxu0 %v704
      %917 = vmatprep.subr.bf16.mxu0 %v701
      %918 = vmatpush1.bf16.msra.mxu0 %v700
      %919 = vmatprep.subr.bf16.mxu0 %v697
      %920 = vmatpush1.bf16.msra.mxu0 %v696
      %921 = vmatprep.subr.bf16.mxu0 %v693
      %922 = vmatpush1.bf16.msra.mxu0 %v692
      %923 = vmatprep.subr.bf16.mxu0 %v689
      %924 = vmatpush1.bf16.msra.mxu0 %v688
      %925 = vmatprep.subr.bf16.mxu0 0
      %926 = vmatpush2.bf16.msra.mxu0 0
      %927 = vmatprep.subr.bf16.mxu0 0
      %928 = vmatpush2.bf16.msra.mxu0 0
      %929 = vmatprep.subr.bf16.mxu0 0
      %930 = vmatpush2.bf16.msra.mxu0 0
      %931 = vmatprep.subr.bf16.mxu0 0
      %932 = vmatpush2.bf16.msra.mxu0 0
      %933 = vmatprep.subr.bf16.mxu0 0
      %934 = vmatpush2.bf16.msra.mxu0 0
      %935 = vmatprep.subr.bf16.mxu0 0
      %936 = vmatpush2.bf16.msra.mxu0 0
      %937 = vmatprep.subr.bf16.mxu0 0
      %938 = vmatpush2.bf16.msra.mxu0 0
      %939 = vmatprep.subr.bf16.mxu0 0
      %940 = vmatpush2.bf16.msra.mxu0 0
      %941 = vmatprep.mubr.bf16.mxu0 0
      %942 = vmatmul.mubr.bf16.gmra.mxu0 %v867
      %v943 = vpop.f32.mrf.mxu0
      %v944 = vadd.f32 0.0, %v943
      %v945 = vpop.f32.mrf.mxu0
      %v946 = vadd.f32 0.0, %v945
      %v947 = vpop.f32.mrf.mxu0
      %v948 = vpop.f32.mrf.mxu0
      %949 = vdwg.mxu0
      %v950 = vadd.f32 %v863, %v903
      %v951 = vadd.f32 %v864, %v905
      %v952 = vadd.f32 %v865, %v944
      %v953 = vadd.f32 %v866, %v946
      %v954 = vxor.u32 %v950, 2147483648
      %v955 = vmul.f32 %v954, 1.442695
      %v956 = vpow.pop %v955
      %v957 = vadd.f32 %v956, 1.0
      %v958 = vrcp.pop %v957
      %v959 = vmul.f32 1.0, %v958
      %v960 = vtanh.pop %v952
      %v961 = vmul.f32 %v959, %v960
      %v962 = vxor.u32 %v951, 2147483648
      %v963 = vmul.f32 %v962, 1.442695
      %v964 = vpow.pop %v963
      %v965 = vadd.f32 %v964, 1.0
      %v966 = vrcp.pop %v965
      %v967 = vmul.f32 1.0, %v966
      %v968 = vmul.f32 %v967, %v851
      %v969 = vadd.f32 %v968, %v961
      %v970 = vxor.u32 %v953, 2147483648
      %v971 = vmul.f32 %v970, 1.442695
      %v972 = vpow.pop %v971
      %v973 = vadd.f32 %v972, 1.0
      %v974 = vrcp.pop %v973
      %v975 = vmul.f32 1.0, %v974
      %v976 = vtanh.pop %v969
      %v977 = vmul.f32 %v975, %v976
      %s978 = smul.u32 2, 4
      %s979 = smul.addr %s978, 8
      %s980 = scalar_lea.vmem [#allocation2], %s979
      %v981 = vld [vmem:[%s980] sm:$0xff]
      %v982 = vld [vmem:[%s980 + $0x8] sm:$0xff]
      %v983 = vld [vmem:[%s980 + $0x10] sm:$0xff]
      %v984 = vld [vmem:[%s980 + $0x18] sm:$0xff]
      %v985 = vpack.c.bf16 %v977, %v977
      %986 = vmatprep.subr.bf16.mxu0 %v715
      %987 = vmatpush1.bf16.msra.mxu0 %v714
      %988 = vmatprep.subr.bf16.mxu0 %v711
      %989 = vmatpush1.bf16.msra.mxu0 %v710
      %990 = vmatprep.subr.bf16.mxu0 %v707
      %991 = vmatpush1.bf16.msra.mxu0 %v706
      %992 = vmatprep.subr.bf16.mxu0 %v703
      %993 = vmatpush1.bf16.msra.mxu0 %v702
      %994 = vmatprep.subr.bf16.mxu0 %v699
      %995 = vmatpush1.bf16.msra.mxu0 %v698
      %996 = vmatprep.subr.bf16.mxu0 %v695
      %997 = vmatpush1.bf16.msra.mxu0 %v694
      %998 = vmatprep.subr.bf16.mxu0 %v691
      %999 = vmatpush1.bf16.msra.mxu0 %v690
      %1000 = vmatprep.subr.bf16.mxu0 %v687
      %1001 = vmatpush1.bf16.msra.mxu0 %v686
      %1002 = vmatprep.subr.bf16.mxu0 0
      %1003 = vmatpush2.bf16.msra.mxu0 0
      %1004 = vmatprep.subr.bf16.mxu0 0
      %1005 = vmatpush2.bf16.msra.mxu0 0
      %1006 = vmatprep.subr.bf16.mxu0 0
      %1007 = vmatpush2.bf16.msra.mxu0 0
      %1008 = vmatprep.subr.bf16.mxu0 0
      %1009 = vmatpush2.bf16.msra.mxu0 0
      %1010 = vmatprep.subr.bf16.mxu0 0
      %1011 = vmatpush2.bf16.msra.mxu0 0
      %1012 = vmatprep.subr.bf16.mxu0 0
      %1013 = vmatpush2.bf16.msra.mxu0 0
      %1014 = vmatprep.subr.bf16.mxu0 0
      %1015 = vmatpush2.bf16.msra.mxu0 0
      %1016 = vmatprep.subr.bf16.mxu0 0
      %1017 = vmatpush2.bf16.msra.mxu0 0
      %1018 = vmatprep.mubr.bf16.mxu0 0
      %1019 = vmatmul.mubr.bf16.gmra.mxu0 %v985
      %v1020 = vpop.f32.mrf.mxu0
      %v1021 = vadd.f32 0.0, %v1020
      %v1022 = vpop.f32.mrf.mxu0
      %v1023 = vadd.f32 0.0, %v1022
      %v1024 = vpop.f32.mrf.mxu0
      %v1025 = vpop.f32.mrf.mxu0
      %1026 = vdwg.mxu0
      %1027 = vmatprep.subr.bf16.mxu0 %v717
      %1028 = vmatpush1.bf16.msra.mxu0 %v716
      %1029 = vmatprep.subr.bf16.mxu0 %v713
      %1030 = vmatpush1.bf16.msra.mxu0 %v712
      %1031 = vmatprep.subr.bf16.mxu0 %v709
      %1032 = vmatpush1.bf16.msra.mxu0 %v708
      %1033 = vmatprep.subr.bf16.mxu0 %v705
      %1034 = vmatpush1.bf16.msra.mxu0 %v704
      %1035 = vmatprep.subr.bf16.mxu0 %v701
      %1036 = vmatpush1.bf16.msra.mxu0 %v700
      %1037 = vmatprep.subr.bf16.mxu0 %v697
      %1038 = vmatpush1.bf16.msra.mxu0 %v696
      %1039 = vmatprep.subr.bf16.mxu0 %v693
      %1040 = vmatpush1.bf16.msra.mxu0 %v692
      %1041 = vmatprep.subr.bf16.mxu0 %v689
      %1042 = vmatpush1.bf16.msra.mxu0 %v688
      %1043 = vmatprep.subr.bf16.mxu0 0
      %1044 = vmatpush2.bf16.msra.mxu0 0
      %1045 = vmatprep.subr.bf16.mxu0 0
      %1046 = vmatpush2.bf16.msra.mxu0 0
      %1047 = vmatprep.subr.bf16.mxu0 0
      %1048 = vmatpush2.bf16.msra.mxu0 0
      %1049 = vmatprep.subr.bf16.mxu0 0
      %1050 = vmatpush2.bf16.msra.mxu0 0
      %1051 = vmatprep.subr.bf16.mxu0 0
      %1052 = vmatpush2.bf16.msra.mxu0 0
      %1053 = vmatprep.subr.bf16.mxu0 0
      %1054 = vmatpush2.bf16.msra.mxu0 0
      %1055 = vmatprep.subr.bf16.mxu0 0
      %1056 = vmatpush2.bf16.msra.mxu0 0
      %1057 = vmatprep.subr.bf16.mxu0 0
      %1058 = vmatpush2.bf16.msra.mxu0 0
      %1059 = vmatprep.mubr.bf16.mxu0 0
      %1060 = vmatmul.mubr.bf16.gmra.mxu0 %v985
      %v1061 = vpop.f32.mrf.mxu0
      %v1062 = vadd.f32 0.0, %v1061
      %v1063 = vpop.f32.mrf.mxu0
      %v1064 = vadd.f32 0.0, %v1063
      %v1065 = vpop.f32.mrf.mxu0
      %v1066 = vpop.f32.mrf.mxu0
      %1067 = vdwg.mxu0
      %v1068 = vadd.f32 %v981, %v1021
      %v1069 = vadd.f32 %v982, %v1023
      %v1070 = vadd.f32 %v983, %v1062
      %v1071 = vadd.f32 %v984, %v1064
      %v1072 = vxor.u32 %v1068, 2147483648
      %v1073 = vmul.f32 %v1072, 1.442695
      %v1074 = vpow.pop %v1073
      %v1075 = vadd.f32 %v1074, 1.0
      %v1076 = vrcp.pop %v1075
      %v1077 = vmul.f32 1.0, %v1076
      %v1078 = vtanh.pop %v1070
      %v1079 = vmul.f32 %v1077, %v1078
      %v1080 = vxor.u32 %v1069, 2147483648
      %v1081 = vmul.f32 %v1080, 1.442695
      %v1082 = vpow.pop %v1081
      %v1083 = vadd.f32 %v1082, 1.0
      %v1084 = vrcp.pop %v1083
      %v1085 = vmul.f32 1.0, %v1084
      %v1086 = vmul.f32 %v1085, %v969
      %v1087 = vadd.f32 %v1086, %v1079
      %v1088 = vxor.u32 %v1071, 2147483648
      %v1089 = vmul.f32 %v1088, 1.442695
      %v1090 = vpow.pop %v1089
      %v1091 = vadd.f32 %v1090, 1.0
      %v1092 = vrcp.pop %v1091
      %v1093 = vmul.f32 1.0, %v1092
      %v1094 = vtanh.pop %v1087
      %v1095 = vmul.f32 %v1093, %v1094
      %s1096 = smul.u32 3, 4
      %s1097 = smul.addr %s1096, 8
      %s1098 = scalar_lea.vmem [#allocation2], %s1097
      %v1099 = vld [vmem:[%s1098] sm:$0xff]
      %v1100 = vld [vmem:[%s1098 + $0x8] sm:$0xff]
      %v1101 = vld [vmem:[%s1098 + $0x10] sm:$0xff]
      %v1102 = vld [vmem:[%s1098 + $0x18] sm:$0xff]
      %v1103 = vpack.c.bf16 %v1095, %v1095
      %1104 = vmatprep.subr.bf16.mxu0 %v715
      %1105 = vmatpush1.bf16.msra.mxu0 %v714
      %1106 = vmatprep.subr.bf16.mxu0 %v711
      %1107 = vmatpush1.bf16.msra.mxu0 %v710
      %1108 = vmatprep.subr.bf16.mxu0 %v707
      %1109 = vmatpush1.bf16.msra.mxu0 %v706
      %1110 = vmatprep.subr.bf16.mxu0 %v703
      %1111 = vmatpush1.bf16.msra.mxu0 %v702
      %1112 = vmatprep.subr.bf16.mxu0 %v699
      %1113 = vmatpush1.bf16.msra.mxu0 %v698
      %1114 = vmatprep.subr.bf16.mxu0 %v695
      %1115 = vmatpush1.bf16.msra.mxu0 %v694
      %1116 = vmatprep.subr.bf16.mxu0 %v691
      %1117 = vmatpush1.bf16.msra.mxu0 %v690
      %1118 = vmatprep.subr.bf16.mxu0 %v687
      %1119 = vmatpush1.bf16.msra.mxu0 %v686
      %1120 = vmatprep.subr.bf16.mxu0 0
      %1121 = vmatpush2.bf16.msra.mxu0 0
      %1122 = vmatprep.subr.bf16.mxu0 0
      %1123 = vmatpush2.bf16.msra.mxu0 0
      %1124 = vmatprep.subr.bf16.mxu0 0
      %1125 = vmatpush2.bf16.msra.mxu0 0
      %1126 = vmatprep.subr.bf16.mxu0 0
      %1127 = vmatpush2.bf16.msra.mxu0 0
      %1128 = vmatprep.subr.bf16.mxu0 0
      %1129 = vmatpush2.bf16.msra.mxu0 0
      %1130 = vmatprep.subr.bf16.mxu0 0
      %1131 = vmatpush2.bf16.msra.mxu0 0
      %1132 = vmatprep.subr.bf16.mxu0 0
      %1133 = vmatpush2.bf16.msra.mxu0 0
      %1134 = vmatprep.subr.bf16.mxu0 0
      %1135 = vmatpush2.bf16.msra.mxu0 0
      %1136 = vmatprep.mubr.bf16.mxu0 0
      %1137 = vmatmul.mubr.bf16.gmra.mxu0 %v1103
      %v1138 = vpop.f32.mrf.mxu0
      %v1139 = vadd.f32 0.0, %v1138
      %v1140 = vpop.f32.mrf.mxu0
      %v1141 = vadd.f32 0.0, %v1140
      %v1142 = vpop.f32.mrf.mxu0
      %v1143 = vpop.f32.mrf.mxu0
      %1144 = vdwg.mxu0
      %1145 = vmatprep.subr.bf16.mxu0 %v717
      %1146 = vmatpush1.bf16.msra.mxu0 %v716
      %1147 = vmatprep.subr.bf16.mxu0 %v713
      %1148 = vmatpush1.bf16.msra.mxu0 %v712
      %1149 = vmatprep.subr.bf16.mxu0 %v709
      %1150 = vmatpush1.bf16.msra.mxu0 %v708
      %1151 = vmatprep.subr.bf16.mxu0 %v705
      %1152 = vmatpush1.bf16.msra.mxu0 %v704
      %1153 = vmatprep.subr.bf16.mxu0 %v701
      %1154 = vmatpush1.bf16.msra.mxu0 %v700
      %1155 = vmatprep.subr.bf16.mxu0 %v697
      %1156 = vmatpush1.bf16.msra.mxu0 %v696
      %1157 = vmatprep.subr.bf16.mxu0 %v693
      %1158 = vmatpush1.bf16.msra.mxu0 %v692
      %1159 = vmatprep.subr.bf16.mxu0 %v689
      %1160 = vmatpush1.bf16.msra.mxu0 %v688
      %1161 = vmatprep.subr.bf16.mxu0 0
      %1162 = vmatpush2.bf16.msra.mxu0 0
      %1163 = vmatprep.subr.bf16.mxu0 0
      %1164 = vmatpush2.bf16.msra.mxu0 0
      %1165 = vmatprep.subr.bf16.mxu0 0
      %1166 = vmatpush2.bf16.msra.mxu0 0
      %1167 = vmatprep.subr.bf16.mxu0 0
      %1168 = vmatpush2.bf16.msra.mxu0 0
      %1169 = vmatprep.subr.bf16.mxu0 0
      %1170 = vmatpush2.bf16.msra.mxu0 0
      %1171 = vmatprep.subr.bf16.mxu0 0
      %1172 = vmatpush2.bf16.msra.mxu0 0
      %1173 = vmatprep.subr.bf16.mxu0 0
      %1174 = vmatpush2.bf16.msra.mxu0 0
      %1175 = vmatprep.subr.bf16.mxu0 0
      %1176 = vmatpush2.bf16.msra.mxu0 0
      %1177 = vmatprep.mubr.bf16.mxu0 0
      %1178 = vmatmul.mubr.bf16.gmra.mxu0 %v1103
      %v1179 = vpop.f32.mrf.mxu0
      %v1180 = vadd.f32 0.0, %v1179
      %v1181 = vpop.f32.mrf.mxu0
      %v1182 = vadd.f32 0.0, %v1181
      %v1183 = vpop.f32.mrf.mxu0
      %v1184 = vpop.f32.mrf.mxu0
      %1185 = vdwg.mxu0
      %v1186 = vadd.f32 %v1099, %v1139
      %v1187 = vadd.f32 %v1100, %v1141
      %v1188 = vadd.f32 %v1101, %v1180
      %v1189 = vadd.f32 %v1102, %v1182
      %v1190 = vxor.u32 %v1186, 2147483648
      %v1191 = vmul.f32 %v1190, 1.442695
      %v1192 = vpow.pop %v1191
      %v1193 = vadd.f32 %v1192, 1.0
      %v1194 = vrcp.pop %v1193
      %v1195 = vmul.f32 1.0, %v1194
      %v1196 = vtanh.pop %v1188
      %v1197 = vmul.f32 %v1195, %v1196
      %v1198 = vxor.u32 %v1187, 2147483648
      %v1199 = vmul.f32 %v1198, 1.442695
      %v1200 = vpow.pop %v1199
      %v1201 = vadd.f32 %v1200, 1.0
      %v1202 = vrcp.pop %v1201
      %v1203 = vmul.f32 1.0, %v1202
      %v1204 = vmul.f32 %v1203, %v1087
      %v1205 = vadd.f32 %v1204, %v1197
      %v1206 = vxor.u32 %v1189, 2147483648
      %v1207 = vmul.f32 %v1206, 1.442695
      %v1208 = vpow.pop %v1207
      %v1209 = vadd.f32 %v1208, 1.0
      %v1210 = vrcp.pop %v1209
      %v1211 = vmul.f32 1.0, %v1210
      %v1212 = vtanh.pop %v1205
      %v1213 = vmul.f32 %v1211, %v1212
      %1214 = vst [vmem:[%s345] sm:$0xff] %v1213
      %1215 = vst [vmem:[%s349] sm:$0xff] %v1205
      %p1216 = scmp.lt.s32.totalorder %s23, 0
      %s1217 = scalar_select %p1216, %s23, 0
      %s1218 = smul.addr %s1217, 8
      %s1219 = scalar_lea.vmem %s6, %s1218
      %p1220 = scmp.lt.s32.totalorder %s23, 0
      %s1221 = scalar_select %p1220, %s23, 0
      %s1222 = smul.addr %s1221, 8
      %s1223 = scalar_lea.vmem %s7, %s1222
      // Predicated region
      $region49: #{classifier_forward.1} parent=43 // pred_check
        %p1224 = pneg %p192
      $region50: #{classifier_forward.1} parent=43 // pred_check_branch
        %1226 = sbr.rel (%p1224) target = $region52
      $region51: #{classifier_forward.1} parent=43 // pred_region
        _
      $region52: #{classifier_forward.1} parent=43 // pred_fallthru
        _
      // Predicated region
      $region53: #{classifier_forward.1} parent=43 // pred_check
        %p1227 = pneg %p218
      $region54: #{classifier_forward.1} parent=43 // pred_check_branch
        %1229 = sbr.rel (%p1227) target = $region56
      $region55: #{classifier_forward.1} parent=43 // pred_region
        _
      $region56: #{classifier_forward.1} parent=43 // pred_fallthru
        _
      // Predicated region
      $region57: #{classifier_forward.1} parent=43 // pred_check
        %p1230 = pneg %p192
      $region58: #{classifier_forward.1} parent=43 // pred_check_branch
        %1232 = sbr.rel (%p1230) target = $region60
      $region59: #{classifier_forward.1} parent=43 // pred_region
        %p1233 = scmp.lt.s32.totalorder %s23, 0
        %s1234 = scalar_select %p1233, %s23, 0
        %s1235 = smul.addr %s1234, 8
        %s1236 = scalar_lea.vmem %s6, %s1235
      $region60: #{classifier_forward.1} parent=43 // pred_fallthru
        _
      // Predicated region
      $region61: #{classifier_forward.1} parent=43 // pred_check
        %p1237 = pneg %p218
      $region62: #{classifier_forward.1} parent=43 // pred_check_branch
        %1239 = sbr.rel (%p1237) target = $region64
      $region63: #{classifier_forward.1} parent=43 // pred_region
        %p1240 = scmp.lt.s32.totalorder %s23, 0
        %s1241 = scalar_select %p1240, %s23, 0
        %s1242 = smul.addr %s1241, 8
        %s1243 = scalar_lea.vmem %s7, %s1242
      $region64: #{classifier_forward.1} parent=43 // pred_fallthru
        _
    $region44: #{classifier_forward.1} parent=5 // pred_fallthru
      _
    %p1244 = scmp.le.s32.totalorder 2, %s14
    // Predicated region
    $region65: #{classifier_forward.1} parent=5 // pred_check
      %p1245 = pneg %p1244
    $region66: #{classifier_forward.1} parent=5 // pred_check_branch
      %1247 = sbr.rel (%p1245) target = $region68
    $region67: #{classifier_forward.1} parent=5 // pred_region
      %s1248 = ssub.s32 %s14, 2
    $region68: #{classifier_forward.1} parent=5 // pred_fallthru
      _
  $region6: #{classifier_forward.1} parent=0 // loop_footer
    %s18 = sadd.s32 1, %s14
  $region7: #{classifier_forward.1} parent=0 // loop_footer_branch
    %13 = sbr.rel target = $region3
  $region8: #{classifier_forward.1} parent=0 // loop_exit
    _

</llo_original>
